<compile_context>
chip_gen: v6e
topology: v6e:2x2x1
jax: 0.10.0
libtpu: 0.0.40
codegen_flags: <defaults>
</compile_context>

<pallas_src>
import functools

import jax
import jax.numpy as jnp
from jax.experimental import pallas as pl
from jax.experimental.pallas import tpu as pltpu

IN_DIM = 512
HID_DIM = 512
OUT_DIM = 10
OUT_PAD = 128                      # lane-dense output width (multiple of 128)
MM_DTYPE = jnp.bfloat16            # MXU input dtype (f32 accumulation)


def _mlp_kernel(x_ref, w1_ref, b1_ref, w2_ref, b2_ref, w3_ref, b3_ref, o_ref):
    # Cast activations to bf16 in-kernel (cheap VPU work, hidden under MXU).
    x = x_ref[...].astype(MM_DTYPE)
    # fc1 + ReLU : (TM, 512) @ (512, 512), f32 accumulate
    h1 = jnp.dot(x, w1_ref[...], preferred_element_type=jnp.float32)
    h1 = jnp.maximum(h1 + b1_ref[...], 0.0)
    # fc2 + ReLU : (TM, 512) @ (512, 512)
    h2 = jnp.dot(h1.astype(MM_DTYPE), w2_ref[...],
                 preferred_element_type=jnp.float32)
    h2 = jnp.maximum(h2 + b2_ref[...], 0.0)
    # fc3 (logits, padded to 128 lanes) : (TM, 512) @ (512, 128)
    h3 = jnp.dot(h2.astype(MM_DTYPE), w3_ref[...],
                 preferred_element_type=jnp.float32)
    o_ref[...] = h3 + b3_ref[...]


def _round_up(x, m):
    return ((x + m - 1) // m) * m


def prepare_params(params):
    """One-time parameter prep (do NOT call per forward).

    PyTorch nn.Linear stores weight as (out, in); the kernel wants (in, out).
    fc3 output channels are padded 10 -> 128 so stores are lane-dense.
    Weights are cast to bf16 once here; biases stay f32.
    """
    w3 = jnp.pad(params["w3"].T, ((0, 0), (0, OUT_PAD - OUT_DIM)))
    b3 = jnp.pad(params["b3"], (0, OUT_PAD - OUT_DIM))
    return {
        "w1": params["w1"].T.astype(MM_DTYPE),                 # (512, 512) bf16
        "w2": params["w2"].T.astype(MM_DTYPE),                 # (512, 512) bf16
        "w3": w3.astype(MM_DTYPE),                             # (512, 128) bf16
        "b1": params["b1"].reshape(1, HID_DIM).astype(jnp.float32),
        "b2": params["b2"].reshape(1, HID_DIM).astype(jnp.float32),
        "b3": b3.reshape(1, OUT_PAD).astype(jnp.float32),
    }


def _choose_tile(M, block_m):
    # Tile the batch/M dimension; sublane multiple of 8 (f32 input tile).
    tm = min(block_m, _round_up(max(M, 1), 8))
    # v7x megacore: make sure the "parallel" M axis has >= 2 grid steps when
    # there is enough work, so it can shard across both TensorCores.
    if M >= 256 and pl.cdiv(M, tm) < 2:
        tm = _round_up(pl.cdiv(M, 2), 8)
    return tm


def label_predictor_forward(h, prepped, *, block_m=512):
    """Forward pass equivalent to LabelPredictor.forward.

    h:       (M, 512) float32
    prepped: output of prepare_params()
    returns  (M, 10) float32 logits.
    """
    M, K = h.shape
    assert K == IN_DIM

    tm = _choose_tile(M, block_m)
    grid = (pl.cdiv(M, tm),)       # edge block (if any) is masked by Pallas

    flops = 2 * M * (IN_DIM * HID_DIM + HID_DIM * HID_DIM + HID_DIM * OUT_PAD)
    bytes_accessed = (
        M * IN_DIM * 4                                            # x (f32)
        + (prepped["w1"].size + prepped["w2"].size + prepped["w3"].size) * 2
        + (prepped["b1"].size + prepped["b2"].size + prepped["b3"].size) * 4
        + M * OUT_PAD * 4                                         # out (f32)
    )

    out_padded = pl.pallas_call(
        _mlp_kernel,
        out_shape=jax.ShapeDtypeStruct((M, OUT_PAD), jnp.float32),
        grid=grid,
        in_specs=[
            pl.BlockSpec((tm, IN_DIM), lambda i: (i, 0)),        # x tile streams
            pl.BlockSpec((IN_DIM, HID_DIM), lambda i: (0, 0)),   # w1 resident
            pl.BlockSpec((1, HID_DIM), lambda i: (0, 0)),        # b1 resident
            pl.BlockSpec((HID_DIM, HID_DIM), lambda i: (0, 0)),  # w2 resident
            pl.BlockSpec((1, HID_DIM), lambda i: (0, 0)),        # b2 resident
            pl.BlockSpec((HID_DIM, OUT_PAD), lambda i: (0, 0)),  # w3 resident
            pl.BlockSpec((1, OUT_PAD), lambda i: (0, 0)),        # b3 resident
        ],
        out_specs=pl.BlockSpec((tm, OUT_PAD), lambda i: (i, 0)),
        compiler_params=pltpu.CompilerParams(
            dimension_semantics=("parallel",),
            vmem_limit_bytes=32 * 1024 * 1024,
        ),
        cost_estimate=pl.CostEstimate(
            flops=flops, transcendentals=0, bytes_accessed=bytes_accessed),
    )(h, prepped["w1"], prepped["b1"], prepped["w2"], prepped["b2"],
      prepped["w3"], prepped["b3"])

    # Strip the lane padding (10 real logit columns). Downstream code that can
    # consume the padded (M, 128) block directly may skip this slice.
    return out_padded[:, :OUT_DIM]


def init_params(key):
    """Deterministic parameter init matching LabelPredictor's nn.Linear shapes."""
    k1, k2, k3, k4, k5, k6 = jax.random.split(key, 6)
    s1 = 1.0 / jnp.sqrt(IN_DIM)
    s3 = 1.0 / jnp.sqrt(HID_DIM)
    return {
        "w1": jax.random.uniform(k1, (HID_DIM, IN_DIM), jnp.float32, -s1, s1),
        "b1": jax.random.uniform(k2, (HID_DIM,), jnp.float32, -s1, s1),
        "w2": jax.random.uniform(k3, (HID_DIM, HID_DIM), jnp.float32, -s3, s3),
        "b2": jax.random.uniform(k4, (HID_DIM,), jnp.float32, -s3, s3),
        "w3": jax.random.uniform(k5, (OUT_DIM, HID_DIM), jnp.float32, -s3, s3),
        "b3": jax.random.uniform(k6, (OUT_DIM,), jnp.float32, -s3, s3),
    }


if __name__ == "__main__":
    key = jax.random.PRNGKey(0)
    kx, kp = jax.random.split(key)

    B = 2
    h = jax.random.normal(kx, (B, IN_DIM), jnp.float32)
    params = init_params(kp)

    # One-time weight prep (transpose / pad / bf16 cast), outside the per-call path.
    prepped = jax.tree_util.tree_map(jax.block_until_ready, prepare_params(params))

    fwd = jax.jit(functools.partial(label_predictor_forward, block_m=512))
    out = fwd(h, prepped)
    out = jax.block_until_ready(out)

    assert out.shape == (B, OUT_DIM), out.shape
    assert bool(jnp.all(jnp.isfinite(out)))

    # Pure-JAX reference (f32) — bf16 MXU inputs with f32 accumulation should
    # match within a loose tolerance.
    ref = jnp.maximum(h @ params["w1"].T + params["b1"], 0.0)
    ref = jnp.maximum(ref @ params["w2"].T + params["b2"], 0.0)
    ref = ref @ params["w3"].T + params["b3"]
    assert jnp.allclose(out, ref, atol=1e-1, rtol=5e-2), float(
        jnp.max(jnp.abs(out - ref)))

    print("KERNEL_OK")
</pallas_src>

<mosaic_0001>
module attributes {stable_mosaic.version = 11 : i64} {
  func.func @_mlp_kernel(%arg0: i32, %arg1: memref<8x512xf32, #tpu.memory_space<vmem>>, %arg2: memref<512x512xbf16, #tpu.memory_space<vmem>>, %arg3: memref<1x512xf32, #tpu.memory_space<vmem>>, %arg4: memref<512x512xbf16, #tpu.memory_space<vmem>>, %arg5: memref<1x512xf32, #tpu.memory_space<vmem>>, %arg6: memref<512x128xbf16, #tpu.memory_space<vmem>>, %arg7: memref<1x128xf32, #tpu.memory_space<vmem>>, %arg8: memref<8x128xf32, #tpu.memory_space<vmem>>) attributes {dimension_semantics = [#tpu.dimension_semantics<parallel>], iteration_bounds = array<i64: 1>, scalar_prefetch = 0 : i64, scratch_operands = 0 : i64, tpu.core_type = #tpu.core_type<tc>, window_params = [{transform_indices = @transform_0, window_bounds = array<i64: 8, 512>}, {pipeline_mode = #tpu.pipeline_mode<synchronous>, transform_indices = @transform_1, window_bounds = array<i64: 512, 512>}, {pipeline_mode = #tpu.pipeline_mode<synchronous>, transform_indices = @transform_2, window_bounds = array<i64: 1, 512>}, {pipeline_mode = #tpu.pipeline_mode<synchronous>, transform_indices = @transform_3, window_bounds = array<i64: 512, 512>}, {pipeline_mode = #tpu.pipeline_mode<synchronous>, transform_indices = @transform_4, window_bounds = array<i64: 1, 512>}, {pipeline_mode = #tpu.pipeline_mode<synchronous>, transform_indices = @transform_5, window_bounds = array<i64: 512, 128>}, {pipeline_mode = #tpu.pipeline_mode<synchronous>, transform_indices = @transform_6, window_bounds = array<i64: 1, 128>}, {transform_indices = @transform_7, window_bounds = array<i64: 8, 128>}]} {
    %c0 = arith.constant 0 : index
    %c0_0 = arith.constant 0 : index
    %0 = vector.load %arg1[%c0, %c0_0] : memref<8x512xf32, #tpu.memory_space<vmem>>, vector<8x512xf32>
    %1 = arith.truncf %0 : vector<8x512xf32> to vector<8x512xbf16>
    %c0_1 = arith.constant 0 : index
    %c0_2 = arith.constant 0 : index
    %2 = vector.load %arg2[%c0_1, %c0_2] : memref<512x512xbf16, #tpu.memory_space<vmem>>, vector<512x512xbf16>
    %cst = arith.constant dense<0.000000e+00> : vector<8x512xf32>
    %3 = tpu.matmul %1, %2, %cst {dimension_numbers = #tpu.dot_dimension_numbers<[1], [0], [0], [1], [0, 0, 1, 1], [], []>} : vector<8x512xbf16>, vector<512x512xbf16>, vector<8x512xf32> -> vector<8x512xf32>
    %c0_3 = arith.constant 0 : index
    %c0_4 = arith.constant 0 : index
    %4 = vector.load %arg3[%c0_3, %c0_4] : memref<1x512xf32, #tpu.memory_space<vmem>>, vector<1x512xf32>
    %5 = vector.broadcast %4 : vector<1x512xf32> to vector<8x512xf32>
    %6 = arith.addf %3, %5 : vector<8x512xf32>
    %cst_5 = arith.constant 0.000000e+00 : f32
    %7 = vector.broadcast %cst_5 : f32 to vector<8x512xf32>
    %8 = arith.maximumf %6, %7 : vector<8x512xf32>
    %9 = arith.truncf %8 : vector<8x512xf32> to vector<8x512xbf16>
    %c0_6 = arith.constant 0 : index
    %c0_7 = arith.constant 0 : index
    %10 = vector.load %arg4[%c0_6, %c0_7] : memref<512x512xbf16, #tpu.memory_space<vmem>>, vector<512x512xbf16>
    %cst_8 = arith.constant dense<0.000000e+00> : vector<8x512xf32>
    %11 = tpu.matmul %9, %10, %cst_8 {dimension_numbers = #tpu.dot_dimension_numbers<[1], [0], [0], [1], [0, 0, 1, 1], [], []>} : vector<8x512xbf16>, vector<512x512xbf16>, vector<8x512xf32> -> vector<8x512xf32>
    %c0_9 = arith.constant 0 : index
    %c0_10 = arith.constant 0 : index
    %12 = vector.load %arg5[%c0_9, %c0_10] : memref<1x512xf32, #tpu.memory_space<vmem>>, vector<1x512xf32>
    %13 = vector.broadcast %12 : vector<1x512xf32> to vector<8x512xf32>
    %14 = arith.addf %11, %13 : vector<8x512xf32>
    %cst_11 = arith.constant 0.000000e+00 : f32
    %15 = vector.broadcast %cst_11 : f32 to vector<8x512xf32>
    %16 = arith.maximumf %14, %15 : vector<8x512xf32>
    %17 = arith.truncf %16 : vector<8x512xf32> to vector<8x512xbf16>
    %c0_12 = arith.constant 0 : index
    %c0_13 = arith.constant 0 : index
    %18 = vector.load %arg6[%c0_12, %c0_13] : memref<512x128xbf16, #tpu.memory_space<vmem>>, vector<512x128xbf16>
    %cst_14 = arith.constant dense<0.000000e+00> : vector<8x128xf32>
    %19 = tpu.matmul %17, %18, %cst_14 {dimension_numbers = #tpu.dot_dimension_numbers<[1], [0], [0], [1], [0, 0, 1, 1], [], []>} : vector<8x512xbf16>, vector<512x128xbf16>, vector<8x128xf32> -> vector<8x128xf32>
    %c0_15 = arith.constant 0 : index
    %c0_16 = arith.constant 0 : index
    %20 = vector.load %arg7[%c0_15, %c0_16] : memref<1x128xf32, #tpu.memory_space<vmem>>, vector<1x128xf32>
    %21 = vector.broadcast %20 : vector<1x128xf32> to vector<8x128xf32>
    %22 = arith.addf %19, %21 : vector<8x128xf32>
    %c0_17 = arith.constant 0 : index
    %c0_18 = arith.constant 0 : index
    %23 = vector.load %arg8[%c0_17, %c0_18] : memref<8x128xf32, #tpu.memory_space<vmem>>, vector<8x128xf32>
    tpu.vector_store %arg8[%c0_17, %c0_18], %22 {strides = array<i32>} : memref<8x128xf32, #tpu.memory_space<vmem>>, vector<8x128xf32>,
    return
  }
  func.func @transform_0(%arg0: i32) -> (i32, i32) {
    %c0_i32 = arith.constant 0 : i32
    %c0_i32_0 = arith.constant 0 : i32
    return %arg0, %c0_i32 : i32, i32
  }
  func.func @transform_1(%arg0: i32) -> (i32, i32) {
    %c0_i32 = arith.constant 0 : i32
    %c0_i32_0 = arith.constant 0 : i32
    %c0_i32_1 = arith.constant 0 : i32
    return %c0_i32, %c0_i32_0 : i32, i32
  }
  func.func @transform_2(%arg0: i32) -> (i32, i32) {
    %c0_i32 = arith.constant 0 : i32
    %c0_i32_0 = arith.constant 0 : i32
    %c0_i32_1 = arith.constant 0 : i32
    return %c0_i32, %c0_i32_0 : i32, i32
  }
  func.func @transform_3(%arg0: i32) -> (i32, i32) {
    %c0_i32 = arith.constant 0 : i32
    %c0_i32_0 = arith.constant 0 : i32
    %c0_i32_1 = arith.constant 0 : i32
    return %c0_i32, %c0_i32_0 : i32, i32
  }
  func.func @transform_4(%arg0: i32) -> (i32, i32) {
    %c0_i32 = arith.constant 0 : i32
    %c0_i32_0 = arith.constant 0 : i32
    %c0_i32_1 = arith.constant 0 : i32
    return %c0_i32, %c0_i32_0 : i32, i32
  }
  func.func @transform_5(%arg0: i32) -> (i32, i32) {
    %c0_i32 = arith.constant 0 : i32
    %c0_i32_0 = arith.constant 0 : i32
    %c0_i32_1 = arith.constant 0 : i32
    return %c0_i32, %c0_i32_0 : i32, i32
  }
  func.func @transform_6(%arg0: i32) -> (i32, i32) {
    %c0_i32 = arith.constant 0 : i32
    %c0_i32_0 = arith.constant 0 : i32
    %c0_i32_1 = arith.constant 0 : i32
    return %c0_i32, %c0_i32_0 : i32, i32
  }
  func.func @transform_7(%arg0: i32) -> (i32, i32) {
    %c0_i32 = arith.constant 0 : i32
    %c0_i32_0 = arith.constant 0 : i32
    return %arg0, %c0_i32 : i32, i32
  }
}

</mosaic_0001>

<llo_original>
// kernel: label_predictor_forward.1
$region0: #{label_predictor_forward.1}
  #allocation0 [shape = 'u32[]', space=smem, size = 0x4, offset = 0x4, fixed_abs, tag = 'smem constant byte address 0x4 - core index']
  #allocation1 [shape = 'u32[144,128]{1,0:T(1,128)}', space=vmem, size = 0x12000, scoped, tag = 'internal scratch']
  %s0 = inlined_call_operand.hbm [shape: f32[2,512], index: 0, kind: input, shape index: {}]
  %s1 = inlined_call_operand.hbm [shape: bf16[512,512], index: 1, kind: input, shape index: {}]
  %s2 = inlined_call_operand.hbm [shape: f32[1,512], index: 2, kind: input, shape index: {}]
  %s3 = inlined_call_operand.hbm [shape: bf16[512,512], index: 3, kind: input, shape index: {}]
  %s4 = inlined_call_operand.hbm [shape: f32[1,512], index: 4, kind: input, shape index: {}]
  %s5 = inlined_call_operand.hbm [shape: bf16[512,128], index: 5, kind: input, shape index: {}]
  %s6 = inlined_call_operand.vmem [shape: f32[1,128], index: 6, kind: input, shape index: {}]
  %s7 = inlined_call_operand.hbm [shape: f32[2,128], index: 7, kind: output, shape index: {}]
  %s8 = sld [smem:[#allocation0]]
  $region62: #{label_predictor_forward.1} parent=0
    _
  %s10 = ssub.s32 1, %s8
  %s11 = scalar_select 0, %s10, %s8
  $region1: #{label_predictor_forward.1} parent=0
    #allocation2 [shape = 'u8[16384]{0}', space=vmem, size = 0x4000, scoped, tag = 'input window, operand 0, single buffered']
    #allocation3 [shape = 's32[1]{0}', space=sflag, size = 0x4, scoped, tag = 'scoped memory for label_predictor_forward.1']
    #allocation4 [shape = 's32[1]{0}', space=sflag, size = 0x4, scoped, tag = 'scoped memory for label_predictor_forward.1']
    #allocation5 [shape = 'u8[524288]{0}', space=vmem, size = 0x80000, scoped, tag = 'input window, operand 1, single buffered']
    #allocation6 [shape = 's32[1]{0}', space=sflag, size = 0x4, scoped, tag = 'scoped memory for label_predictor_forward.1']
    #allocation7 [shape = 'u8[2048]{0}', space=vmem, size = 0x800, scoped, tag = 'input window, operand 2, single buffered']
    #allocation8 [shape = 'u8[524288]{0}', space=vmem, size = 0x80000, scoped, tag = 'input window, operand 3, single buffered']
    #allocation9 [shape = 's32[1]{0}', space=sflag, size = 0x4, scoped, tag = 'scoped memory for label_predictor_forward.1']
    #allocation10 [shape = 'u8[2048]{0}', space=vmem, size = 0x800, scoped, tag = 'input window, operand 4, single buffered']
    #allocation11 [shape = 'u8[131072]{0}', space=vmem, size = 0x20000, scoped, tag = 'input window, operand 5, single buffered']
    #allocation12 [shape = 's32[1]{0}', space=sflag, size = 0x4, scoped, tag = 'scoped memory for label_predictor_forward.1']
    #allocation13 [shape = 'u8[4096]{0}', space=vmem, size = 0x1000, scoped, tag = 'output window, operand 0, single buffered']
    %12 = vsyncpa [#allocation3], 0
    %13 = vsyncpa [#allocation6], 0
    %14 = vsyncpa [#allocation9], 0
    %15 = vsyncpa [#allocation12], 0
    %16 = vsyncpa [#allocation4], 0
    // Predicated region
    $region2: #{label_predictor_forward.1} parent=1 // pred_check
      _
    $region3: #{label_predictor_forward.1} parent=1 // pred_check_branch
      %18 = sbr.rel (0) target = $region5
    $region4: #{label_predictor_forward.1} parent=1 // pred_region
      %s20 = ssub.s32 512, 128
      %21 = vsyncadd [#allocation3], %s20
      %s22 = sshll.u32 [#allocation2], 4
      %s23 = int_to_ptr.vmem [resolvable:$true] %s22
      %28 = dma.hbm_to_vmem [thread:$0]  %s0, 128, %s23, [#allocation3], 128, 128, 8
    $region5: #{label_predictor_forward.1} parent=1 // pred_fallthru
      _
    // Predicated region
    $region6: #{label_predictor_forward.1} parent=1 // pred_check
      _
    $region7: #{label_predictor_forward.1} parent=1 // pred_check_branch
      %30 = sbr.rel (0) target = $region9
    $region8: #{label_predictor_forward.1} parent=1 // pred_region
      %s32 = ssub.s32 16384, 16384
      %33 = vsyncadd [#allocation6], %s32
      %s34 = sshll.u32 [#allocation5], 4
      %s35 = int_to_ptr.vmem [resolvable:$true] %s34
      %40 = dma.hbm_to_vmem [thread:$0]  %s1, 16384, %s35, [#allocation6], 256, 256, 16
    $region9: #{label_predictor_forward.1} parent=1 // pred_fallthru
      _
    // Predicated region
    $region10: #{label_predictor_forward.1} parent=1 // pred_check
      _
    $region11: #{label_predictor_forward.1} parent=1 // pred_check_branch
      %42 = sbr.rel (0) target = $region13
    $region12: #{label_predictor_forward.1} parent=1 // pred_region
      %s44 = ssub.s32 64, 64
      %45 = vsyncadd [#allocation6], %s44
      %s47 = sshll.u32 [#allocation7], 4
      %s48 = int_to_ptr.vmem [resolvable:$true] %s47
      %50 = dma.hbm_to_vmem [thread:$0]  %s2, 64, %s48, [#allocation6]
    $region13: #{label_predictor_forward.1} parent=1 // pred_fallthru
      _
    // Predicated region
    $region14: #{label_predictor_forward.1} parent=1 // pred_check
      _
    $region15: #{label_predictor_forward.1} parent=1 // pred_check_branch
      %52 = sbr.rel (0) target = $region17
    $region16: #{label_predictor_forward.1} parent=1 // pred_region
      %s54 = ssub.s32 16384, 16384
      %55 = vsyncadd [#allocation9], %s54
      %s56 = sshll.u32 [#allocation8], 4
      %s57 = int_to_ptr.vmem [resolvable:$true] %s56
      %62 = dma.hbm_to_vmem [thread:$0]  %s3, 16384, %s57, [#allocation9], 256, 256, 16
    $region17: #{label_predictor_forward.1} parent=1 // pred_fallthru
      _
    // Predicated region
    $region18: #{label_predictor_forward.1} parent=1 // pred_check
      _
    $region19: #{label_predictor_forward.1} parent=1 // pred_check_branch
      %64 = sbr.rel (0) target = $region21
    $region20: #{label_predictor_forward.1} parent=1 // pred_region
      %s66 = ssub.s32 64, 64
      %67 = vsyncadd [#allocation9], %s66
      %s69 = sshll.u32 [#allocation10], 4
      %s70 = int_to_ptr.vmem [resolvable:$true] %s69
      %72 = dma.hbm_to_vmem [thread:$0]  %s4, 64, %s70, [#allocation9]
    $region21: #{label_predictor_forward.1} parent=1 // pred_fallthru
      _
    // Predicated region
    $region22: #{label_predictor_forward.1} parent=1 // pred_check
      _
    $region23: #{label_predictor_forward.1} parent=1 // pred_check_branch
      %74 = sbr.rel (0) target = $region25
    $region24: #{label_predictor_forward.1} parent=1 // pred_region
      %s76 = ssub.s32 4096, 4096
      %77 = vsyncadd [#allocation12], %s76
      %s78 = sshll.u32 [#allocation11], 4
      %s79 = int_to_ptr.vmem [resolvable:$true] %s78
      %84 = dma.hbm_to_vmem [thread:$0]  %s5, 4096, %s79, [#allocation12], 64, 64, 4
    $region25: #{label_predictor_forward.1} parent=1 // pred_fallthru
      _
    // Predicated region
    $region26: #{label_predictor_forward.1} parent=1 // pred_check
      _
    $region27: #{label_predictor_forward.1} parent=1 // pred_check_branch
      %86 = sbr.rel (0) target = $region29
    $region28: #{label_predictor_forward.1} parent=1 // pred_region
      _
    $region29: #{label_predictor_forward.1} parent=1 // pred_fallthru
      _
    // Predicated region
    $region30: #{label_predictor_forward.1} parent=1 // pred_check
      _
    $region31: #{label_predictor_forward.1} parent=1 // pred_check_branch
      %88 = sbr.rel (0) target = $region33
    $region32: #{label_predictor_forward.1} parent=1 // pred_region
      %89 = dma.done [#allocation3], 512
    $region33: #{label_predictor_forward.1} parent=1 // pred_fallthru
      _
    // Predicated region
    $region34: #{label_predictor_forward.1} parent=1 // pred_check
      _
    $region35: #{label_predictor_forward.1} parent=1 // pred_check_branch
      %91 = sbr.rel (0) target = $region37
    $region36: #{label_predictor_forward.1} parent=1 // pred_region
      %92 = dma.done [#allocation6], 16384
    $region37: #{label_predictor_forward.1} parent=1 // pred_fallthru
      _
    // Predicated region
    $region38: #{label_predictor_forward.1} parent=1 // pred_check
      _
    $region39: #{label_predictor_forward.1} parent=1 // pred_check_branch
      %94 = sbr.rel (0) target = $region41
    $region40: #{label_predictor_forward.1} parent=1 // pred_region
      %95 = dma.done [#allocation6], 64
    $region41: #{label_predictor_forward.1} parent=1 // pred_fallthru
      _
    // Predicated region
    $region42: #{label_predictor_forward.1} parent=1 // pred_check
      _
    $region43: #{label_predictor_forward.1} parent=1 // pred_check_branch
      %97 = sbr.rel (0) target = $region45
    $region44: #{label_predictor_forward.1} parent=1 // pred_region
      %98 = dma.done [#allocation9], 16384
    $region45: #{label_predictor_forward.1} parent=1 // pred_fallthru
      _
    // Predicated region
    $region46: #{label_predictor_forward.1} parent=1 // pred_check
      _
    $region47: #{label_predictor_forward.1} parent=1 // pred_check_branch
      %100 = sbr.rel (0) target = $region49
    $region48: #{label_predictor_forward.1} parent=1 // pred_region
      %101 = dma.done [#allocation9], 64
    $region49: #{label_predictor_forward.1} parent=1 // pred_fallthru
      _
    // Predicated region
    $region50: #{label_predictor_forward.1} parent=1 // pred_check
      _
    $region51: #{label_predictor_forward.1} parent=1 // pred_check_branch
      %103 = sbr.rel (0) target = $region53
    $region52: #{label_predictor_forward.1} parent=1 // pred_region
      %104 = dma.done [#allocation12], 4096
    $region53: #{label_predictor_forward.1} parent=1 // pred_fallthru
      _
    %v106 = vld [vmem:[#allocation2] sm:$0xff]
    %v107 = vld [vmem:[#allocation2 + $0x8] sm:$0xff]
    %v108 = vld [vmem:[#allocation2 + $0x10] sm:$0xff]
    %v109 = vld [vmem:[#allocation2 + $0x18] sm:$0xff]
    %v114 = vcombine.low %v106, %v107
    %v115 = vcombine.high %v106, %v107
    %v116 = vcombine.low %v108, %v109
    %v117 = vcombine.high %v108, %v109
    %v119 = vunpack.c.l.s4 1983009808
    %v120 = vunpack.c.0.s8 %v119
    %v121 = vlaneseq
    %v122 = vshrl.u32 %v121, 7
    %v123 = vsub.s32 %v120, %v122
    %v124 = vrot.slane %v114, %v123
    %v126 = vunpack.c.l.s4 1983009808
    %v127 = vunpack.c.0.s8 %v126
    %v128 = vlaneseq
    %v129 = vshrl.u32 %v128, 7
    %v130 = vsub.s32 %v127, %v129
    %v131 = vrot.slane %v115, %v130
    %v133 = vunpack.c.l.s4 1983009808
    %v134 = vunpack.c.0.s8 %v133
    %v135 = vlaneseq
    %v136 = vshrl.u32 %v135, 7
    %v137 = vsub.s32 %v134, %v136
    %v138 = vrot.slane %v116, %v137
    %v140 = vunpack.c.l.s4 1983009808
    %v141 = vunpack.c.0.s8 %v140
    %v142 = vlaneseq
    %v143 = vshrl.u32 %v142, 7
    %v144 = vsub.s32 %v141, %v143
    %v145 = vrot.slane %v117, %v144
    %v146 = vcombine.low %v124, %v138
    %v147 = vcombine.high %v124, %v138
    %v148 = vcombine.low %v131, %v145
    %v149 = vcombine.high %v131, %v145
    %v154 = vpack.c.bf16 %v146, %v146
    %v155 = vpack.c.bf16 %v147, %v147
    %v156 = vpack.c.bf16 %v148, %v148
    %v157 = vpack.c.bf16 %v149, %v149
    %v158 = vld [vmem:[#allocation5] sm:$0xff]
    %v159 = vld [vmem:[#allocation5 + $0x8] sm:$0xff]
    %v160 = vld [vmem:[#allocation5 + $0x10] sm:$0xff]
    %v161 = vld [vmem:[#allocation5 + $0x18] sm:$0xff]
    %v162 = vld [vmem:[#allocation5 + $0x20] sm:$0xff]
    %v163 = vld [vmem:[#allocation5 + $0x28] sm:$0xff]
    %v164 = vld [vmem:[#allocation5 + $0x30] sm:$0xff]
    %v165 = vld [vmem:[#allocation5 + $0x38] sm:$0xff]
    %v166 = vld [vmem:[#allocation5 + $0x40] sm:$0xff]
    %v167 = vld [vmem:[#allocation5 + $0x48] sm:$0xff]
    %v168 = vld [vmem:[#allocation5 + $0x50] sm:$0xff]
    %v169 = vld [vmem:[#allocation5 + $0x58] sm:$0xff]
    %v170 = vld [vmem:[#allocation5 + $0x60] sm:$0xff]
    %v171 = vld [vmem:[#allocation5 + $0x68] sm:$0xff]
    %v172 = vld [vmem:[#allocation5 + $0x70] sm:$0xff]
    %v173 = vld [vmem:[#allocation5 + $0x78] sm:$0xff]
    %v174 = vld [vmem:[#allocation5 + $0x80] sm:$0xff]
    %v175 = vld [vmem:[#allocation5 + $0x88] sm:$0xff]
    %v176 = vld [vmem:[#allocation5 + $0x90] sm:$0xff]
    %v177 = vld [vmem:[#allocation5 + $0x98] sm:$0xff]
    %v178 = vld [vmem:[#allocation5 + $0xa0] sm:$0xff]
    %v179 = vld [vmem:[#allocation5 + $0xa8] sm:$0xff]
    %v180 = vld [vmem:[#allocation5 + $0xb0] sm:$0xff]
    %v181 = vld [vmem:[#allocation5 + $0xb8] sm:$0xff]
    %v182 = vld [vmem:[#allocation5 + $0xc0] sm:$0xff]
    %v183 = vld [vmem:[#allocation5 + $0xc8] sm:$0xff]
    %v184 = vld [vmem:[#allocation5 + $0xd0] sm:$0xff]
    %v185 = vld [vmem:[#allocation5 + $0xd8] sm:$0xff]
    %v186 = vld [vmem:[#allocation5 + $0xe0] sm:$0xff]
    %v187 = vld [vmem:[#allocation5 + $0xe8] sm:$0xff]
    %v188 = vld [vmem:[#allocation5 + $0xf0] sm:$0xff]
    %v189 = vld [vmem:[#allocation5 + $0xf8] sm:$0xff]
    %v190 = vld [vmem:[#allocation5 + $0x100] sm:$0xff]
    %v191 = vld [vmem:[#allocation5 + $0x108] sm:$0xff]
    %v192 = vld [vmem:[#allocation5 + $0x110] sm:$0xff]
    %v193 = vld [vmem:[#allocation5 + $0x118] sm:$0xff]
    %v194 = vld [vmem:[#allocation5 + $0x120] sm:$0xff]
    %v195 = vld [vmem:[#allocation5 + $0x128] sm:$0xff]
    %v196 = vld [vmem:[#allocation5 + $0x130] sm:$0xff]
    %v197 = vld [vmem:[#allocation5 + $0x138] sm:$0xff]
    %v198 = vld [vmem:[#allocation5 + $0x140] sm:$0xff]
    %v199 = vld [vmem:[#allocation5 + $0x148] sm:$0xff]
    %v200 = vld [vmem:[#allocation5 + $0x150] sm:$0xff]
    %v201 = vld [vmem:[#allocation5 + $0x158] sm:$0xff]
    %v202 = vld [vmem:[#allocation5 + $0x160] sm:$0xff]
    %v203 = vld [vmem:[#allocation5 + $0x168] sm:$0xff]
    %v204 = vld [vmem:[#allocation5 + $0x170] sm:$0xff]
    %v205 = vld [vmem:[#allocation5 + $0x178] sm:$0xff]
    %v206 = vld [vmem:[#allocation5 + $0x180] sm:$0xff]
    %v207 = vld [vmem:[#allocation5 + $0x188] sm:$0xff]
    %v208 = vld [vmem:[#allocation5 + $0x190] sm:$0xff]
    %v209 = vld [vmem:[#allocation5 + $0x198] sm:$0xff]
    %v210 = vld [vmem:[#allocation5 + $0x1a0] sm:$0xff]
    %v211 = vld [vmem:[#allocation5 + $0x1a8] sm:$0xff]
    %v212 = vld [vmem:[#allocation5 + $0x1b0] sm:$0xff]
    %v213 = vld [vmem:[#allocation5 + $0x1b8] sm:$0xff]
    %v214 = vld [vmem:[#allocation5 + $0x1c0] sm:$0xff]
    %v215 = vld [vmem:[#allocation5 + $0x1c8] sm:$0xff]
    %v216 = vld [vmem:[#allocation5 + $0x1d0] sm:$0xff]
    %v217 = vld [vmem:[#allocation5 + $0x1d8] sm:$0xff]
    %v218 = vld [vmem:[#allocation5 + $0x1e0] sm:$0xff]
    %v219 = vld [vmem:[#allocation5 + $0x1e8] sm:$0xff]
    %v220 = vld [vmem:[#allocation5 + $0x1f0] sm:$0xff]
    %v221 = vld [vmem:[#allocation5 + $0x1f8] sm:$0xff]
    %v222 = vld [vmem:[#allocation5 + $0x200] sm:$0xff]
    %v223 = vld [vmem:[#allocation5 + $0x208] sm:$0xff]
    %v224 = vld [vmem:[#allocation5 + $0x210] sm:$0xff]
    %v225 = vld [vmem:[#allocation5 + $0x218] sm:$0xff]
    %v226 = vld [vmem:[#allocation5 + $0x220] sm:$0xff]
    %v227 = vld [vmem:[#allocation5 + $0x228] sm:$0xff]
    %v228 = vld [vmem:[#allocation5 + $0x230] sm:$0xff]
    %v229 = vld [vmem:[#allocation5 + $0x238] sm:$0xff]
    %v230 = vld [vmem:[#allocation5 + $0x240] sm:$0xff]
    %v231 = vld [vmem:[#allocation5 + $0x248] sm:$0xff]
    %v232 = vld [vmem:[#allocation5 + $0x250] sm:$0xff]
    %v233 = vld [vmem:[#allocation5 + $0x258] sm:$0xff]
    %v234 = vld [vmem:[#allocation5 + $0x260] sm:$0xff]
    %v235 = vld [vmem:[#allocation5 + $0x268] sm:$0xff]
    %v236 = vld [vmem:[#allocation5 + $0x270] sm:$0xff]
    %v237 = vld [vmem:[#allocation5 + $0x278] sm:$0xff]
    %v238 = vld [vmem:[#allocation5 + $0x280] sm:$0xff]
    %v239 = vld [vmem:[#allocation5 + $0x288] sm:$0xff]
    %v240 = vld [vmem:[#allocation5 + $0x290] sm:$0xff]
    %v241 = vld [vmem:[#allocation5 + $0x298] sm:$0xff]
    %v242 = vld [vmem:[#allocation5 + $0x2a0] sm:$0xff]
    %v243 = vld [vmem:[#allocation5 + $0x2a8] sm:$0xff]
    %v244 = vld [vmem:[#allocation5 + $0x2b0] sm:$0xff]
    %v245 = vld [vmem:[#allocation5 + $0x2b8] sm:$0xff]
    %v246 = vld [vmem:[#allocation5 + $0x2c0] sm:$0xff]
    %v247 = vld [vmem:[#allocation5 + $0x2c8] sm:$0xff]
    %v248 = vld [vmem:[#allocation5 + $0x2d0] sm:$0xff]
    %v249 = vld [vmem:[#allocation5 + $0x2d8] sm:$0xff]
    %v250 = vld [vmem:[#allocation5 + $0x2e0] sm:$0xff]
    %v251 = vld [vmem:[#allocation5 + $0x2e8] sm:$0xff]
    %v252 = vld [vmem:[#allocation5 + $0x2f0] sm:$0xff]
    %v253 = vld [vmem:[#allocation5 + $0x2f8] sm:$0xff]
    %v254 = vld [vmem:[#allocation5 + $0x300] sm:$0xff]
    %v255 = vld [vmem:[#allocation5 + $0x308] sm:$0xff]
    %v256 = vld [vmem:[#allocation5 + $0x310] sm:$0xff]
    %v257 = vld [vmem:[#allocation5 + $0x318] sm:$0xff]
    %v258 = vld [vmem:[#allocation5 + $0x320] sm:$0xff]
    %v259 = vld [vmem:[#allocation5 + $0x328] sm:$0xff]
    %v260 = vld [vmem:[#allocation5 + $0x330] sm:$0xff]
    %v261 = vld [vmem:[#allocation5 + $0x338] sm:$0xff]
    %v262 = vld [vmem:[#allocation5 + $0x340] sm:$0xff]
    %v263 = vld [vmem:[#allocation5 + $0x348] sm:$0xff]
    %v264 = vld [vmem:[#allocation5 + $0x350] sm:$0xff]
    %v265 = vld [vmem:[#allocation5 + $0x358] sm:$0xff]
    %v266 = vld [vmem:[#allocation5 + $0x360] sm:$0xff]
    %v267 = vld [vmem:[#allocation5 + $0x368] sm:$0xff]
    %v268 = vld [vmem:[#allocation5 + $0x370] sm:$0xff]
    %v269 = vld [vmem:[#allocation5 + $0x378] sm:$0xff]
    %v270 = vld [vmem:[#allocation5 + $0x380] sm:$0xff]
    %v271 = vld [vmem:[#allocation5 + $0x388] sm:$0xff]
    %v272 = vld [vmem:[#allocation5 + $0x390] sm:$0xff]
    %v273 = vld [vmem:[#allocation5 + $0x398] sm:$0xff]
    %v274 = vld [vmem:[#allocation5 + $0x3a0] sm:$0xff]
    %v275 = vld [vmem:[#allocation5 + $0x3a8] sm:$0xff]
    %v276 = vld [vmem:[#allocation5 + $0x3b0] sm:$0xff]
    %v277 = vld [vmem:[#allocation5 + $0x3b8] sm:$0xff]
    %v278 = vld [vmem:[#allocation5 + $0x3c0] sm:$0xff]
    %v279 = vld [vmem:[#allocation5 + $0x3c8] sm:$0xff]
    %v280 = vld [vmem:[#allocation5 + $0x3d0] sm:$0xff]
    %v281 = vld [vmem:[#allocation5 + $0x3d8] sm:$0xff]
    %v282 = vld [vmem:[#allocation5 + $0x3e0] sm:$0xff]
    %v283 = vld [vmem:[#allocation5 + $0x3e8] sm:$0xff]
    %v284 = vld [vmem:[#allocation5 + $0x3f0] sm:$0xff]
    %v285 = vld [vmem:[#allocation5 + $0x3f8] sm:$0xff]
    %v286 = vld [vmem:[#allocation7] sm:$0xf]
    %v288 = vlaneseq
    %v289 = vshrl.u32 %v288, 7
    %v290 = vsub.s32 0, %v289
    %v291 = vrot.slane %v286, %v290
    %v292 = vlaneseq
    %v293 = vshrl.u32 %v292, 7
    %v294 = vsub.s32 1, %v293
    %v295 = vrot.slane %v286, %v294
    %v296 = vlaneseq
    %v297 = vshrl.u32 %v296, 7
    %v298 = vsub.s32 2, %v297
    %v299 = vrot.slane %v286, %v298
    %v300 = vlaneseq
    %v301 = vshrl.u32 %v300, 7
    %v302 = vsub.s32 3, %v301
    %v303 = vrot.slane %v286, %v302
    %v436 = vunpack.c.l.b16 %v158
    %v437 = vunpack.c.h.b16 %v158
    %v438 = vunpack.c.l.b16 %v159
    %v439 = vunpack.c.h.b16 %v159
    %v440 = vunpack.c.l.b16 %v160
    %v441 = vunpack.c.h.b16 %v160
    %v442 = vunpack.c.l.b16 %v161
    %v443 = vunpack.c.h.b16 %v161
    %v444 = vunpack.c.l.b16 %v162
    %v445 = vunpack.c.h.b16 %v162
    %v446 = vunpack.c.l.b16 %v163
    %v447 = vunpack.c.h.b16 %v163
    %v448 = vunpack.c.l.b16 %v164
    %v449 = vunpack.c.h.b16 %v164
    %v450 = vunpack.c.l.b16 %v165
    %v451 = vunpack.c.h.b16 %v165
    %v452 = vunpack.c.l.b16 %v166
    %v453 = vunpack.c.h.b16 %v166
    %v454 = vunpack.c.l.b16 %v167
    %v455 = vunpack.c.h.b16 %v167
    %v456 = vunpack.c.l.b16 %v168
    %v457 = vunpack.c.h.b16 %v168
    %v458 = vunpack.c.l.b16 %v169
    %v459 = vunpack.c.h.b16 %v169
    %v460 = vunpack.c.l.b16 %v170
    %v461 = vunpack.c.h.b16 %v170
    %v462 = vunpack.c.l.b16 %v171
    %v463 = vunpack.c.h.b16 %v171
    %v464 = vunpack.c.l.b16 %v172
    %v465 = vunpack.c.h.b16 %v172
    %v466 = vunpack.c.l.b16 %v173
    %v467 = vunpack.c.h.b16 %v173
    %v468 = vunpack.c.l.b16 %v174
    %v469 = vunpack.c.h.b16 %v174
    %v470 = vunpack.c.l.b16 %v175
    %v471 = vunpack.c.h.b16 %v175
    %v472 = vunpack.c.l.b16 %v176
    %v473 = vunpack.c.h.b16 %v176
    %v474 = vunpack.c.l.b16 %v177
    %v475 = vunpack.c.h.b16 %v177
    %v476 = vunpack.c.l.b16 %v178
    %v477 = vunpack.c.h.b16 %v178
    %v478 = vunpack.c.l.b16 %v179
    %v479 = vunpack.c.h.b16 %v179
    %v480 = vunpack.c.l.b16 %v180
    %v481 = vunpack.c.h.b16 %v180
    %v482 = vunpack.c.l.b16 %v181
    %v483 = vunpack.c.h.b16 %v181
    %v484 = vunpack.c.l.b16 %v182
    %v485 = vunpack.c.h.b16 %v182
    %v486 = vunpack.c.l.b16 %v183
    %v487 = vunpack.c.h.b16 %v183
    %v488 = vunpack.c.l.b16 %v184
    %v489 = vunpack.c.h.b16 %v184
    %v490 = vunpack.c.l.b16 %v185
    %v491 = vunpack.c.h.b16 %v185
    %v492 = vunpack.c.l.b16 %v186
    %v493 = vunpack.c.h.b16 %v186
    %v494 = vunpack.c.l.b16 %v187
    %v495 = vunpack.c.h.b16 %v187
    %v496 = vunpack.c.l.b16 %v188
    %v497 = vunpack.c.h.b16 %v188
    %v498 = vunpack.c.l.b16 %v189
    %v499 = vunpack.c.h.b16 %v189
    %v500 = vunpack.c.l.b16 %v190
    %v501 = vunpack.c.h.b16 %v190
    %v502 = vunpack.c.l.b16 %v191
    %v503 = vunpack.c.h.b16 %v191
    %v504 = vunpack.c.l.b16 %v192
    %v505 = vunpack.c.h.b16 %v192
    %v506 = vunpack.c.l.b16 %v193
    %v507 = vunpack.c.h.b16 %v193
    %v508 = vunpack.c.l.b16 %v194
    %v509 = vunpack.c.h.b16 %v194
    %v510 = vunpack.c.l.b16 %v195
    %v511 = vunpack.c.h.b16 %v195
    %v512 = vunpack.c.l.b16 %v196
    %v513 = vunpack.c.h.b16 %v196
    %v514 = vunpack.c.l.b16 %v197
    %v515 = vunpack.c.h.b16 %v197
    %v516 = vunpack.c.l.b16 %v198
    %v517 = vunpack.c.h.b16 %v198
    %v518 = vunpack.c.l.b16 %v199
    %v519 = vunpack.c.h.b16 %v199
    %v520 = vunpack.c.l.b16 %v200
    %v521 = vunpack.c.h.b16 %v200
    %v522 = vunpack.c.l.b16 %v201
    %v523 = vunpack.c.h.b16 %v201
    %v524 = vunpack.c.l.b16 %v202
    %v525 = vunpack.c.h.b16 %v202
    %v526 = vunpack.c.l.b16 %v203
    %v527 = vunpack.c.h.b16 %v203
    %v528 = vunpack.c.l.b16 %v204
    %v529 = vunpack.c.h.b16 %v204
    %v530 = vunpack.c.l.b16 %v205
    %v531 = vunpack.c.h.b16 %v205
    %v532 = vunpack.c.l.b16 %v206
    %v533 = vunpack.c.h.b16 %v206
    %v534 = vunpack.c.l.b16 %v207
    %v535 = vunpack.c.h.b16 %v207
    %v536 = vunpack.c.l.b16 %v208
    %v537 = vunpack.c.h.b16 %v208
    %v538 = vunpack.c.l.b16 %v209
    %v539 = vunpack.c.h.b16 %v209
    %v540 = vunpack.c.l.b16 %v210
    %v541 = vunpack.c.h.b16 %v210
    %v542 = vunpack.c.l.b16 %v211
    %v543 = vunpack.c.h.b16 %v211
    %v544 = vunpack.c.l.b16 %v212
    %v545 = vunpack.c.h.b16 %v212
    %v546 = vunpack.c.l.b16 %v213
    %v547 = vunpack.c.h.b16 %v213
    %v548 = vunpack.c.l.b16 %v214
    %v549 = vunpack.c.h.b16 %v214
    %v550 = vunpack.c.l.b16 %v215
    %v551 = vunpack.c.h.b16 %v215
    %v552 = vunpack.c.l.b16 %v216
    %v553 = vunpack.c.h.b16 %v216
    %v554 = vunpack.c.l.b16 %v217
    %v555 = vunpack.c.h.b16 %v217
    %v556 = vunpack.c.l.b16 %v218
    %v557 = vunpack.c.h.b16 %v218
    %v558 = vunpack.c.l.b16 %v219
    %v559 = vunpack.c.h.b16 %v219
    %v560 = vunpack.c.l.b16 %v220
    %v561 = vunpack.c.h.b16 %v220
    %v562 = vunpack.c.l.b16 %v221
    %v563 = vunpack.c.h.b16 %v221
    %v564 = vunpack.c.l.b16 %v222
    %v565 = vunpack.c.h.b16 %v222
    %v566 = vunpack.c.l.b16 %v223
    %v567 = vunpack.c.h.b16 %v223
    %v568 = vunpack.c.l.b16 %v224
    %v569 = vunpack.c.h.b16 %v224
    %v570 = vunpack.c.l.b16 %v225
    %v571 = vunpack.c.h.b16 %v225
    %v572 = vunpack.c.l.b16 %v226
    %v573 = vunpack.c.h.b16 %v226
    %v574 = vunpack.c.l.b16 %v227
    %v575 = vunpack.c.h.b16 %v227
    %v576 = vunpack.c.l.b16 %v228
    %v577 = vunpack.c.h.b16 %v228
    %v578 = vunpack.c.l.b16 %v229
    %v579 = vunpack.c.h.b16 %v229
    %v580 = vunpack.c.l.b16 %v230
    %v581 = vunpack.c.h.b16 %v230
    %v582 = vunpack.c.l.b16 %v231
    %v583 = vunpack.c.h.b16 %v231
    %v584 = vunpack.c.l.b16 %v232
    %v585 = vunpack.c.h.b16 %v232
    %v586 = vunpack.c.l.b16 %v233
    %v587 = vunpack.c.h.b16 %v233
    %v588 = vunpack.c.l.b16 %v234
    %v589 = vunpack.c.h.b16 %v234
    %v590 = vunpack.c.l.b16 %v235
    %v591 = vunpack.c.h.b16 %v235
    %v592 = vunpack.c.l.b16 %v236
    %v593 = vunpack.c.h.b16 %v236
    %v594 = vunpack.c.l.b16 %v237
    %v595 = vunpack.c.h.b16 %v237
    %v596 = vunpack.c.l.b16 %v238
    %v597 = vunpack.c.h.b16 %v238
    %v598 = vunpack.c.l.b16 %v239
    %v599 = vunpack.c.h.b16 %v239
    %v600 = vunpack.c.l.b16 %v240
    %v601 = vunpack.c.h.b16 %v240
    %v602 = vunpack.c.l.b16 %v241
    %v603 = vunpack.c.h.b16 %v241
    %v604 = vunpack.c.l.b16 %v242
    %v605 = vunpack.c.h.b16 %v242
    %v606 = vunpack.c.l.b16 %v243
    %v607 = vunpack.c.h.b16 %v243
    %v608 = vunpack.c.l.b16 %v244
    %v609 = vunpack.c.h.b16 %v244
    %v610 = vunpack.c.l.b16 %v245
    %v611 = vunpack.c.h.b16 %v245
    %v612 = vunpack.c.l.b16 %v246
    %v613 = vunpack.c.h.b16 %v246
    %v614 = vunpack.c.l.b16 %v247
    %v615 = vunpack.c.h.b16 %v247
    %v616 = vunpack.c.l.b16 %v248
    %v617 = vunpack.c.h.b16 %v248
    %v618 = vunpack.c.l.b16 %v249
    %v619 = vunpack.c.h.b16 %v249
    %v620 = vunpack.c.l.b16 %v250
    %v621 = vunpack.c.h.b16 %v250
    %v622 = vunpack.c.l.b16 %v251
    %v623 = vunpack.c.h.b16 %v251
    %v624 = vunpack.c.l.b16 %v252
    %v625 = vunpack.c.h.b16 %v252
    %v626 = vunpack.c.l.b16 %v253
    %v627 = vunpack.c.h.b16 %v253
    %v628 = vunpack.c.l.b16 %v254
    %v629 = vunpack.c.h.b16 %v254
    %v630 = vunpack.c.l.b16 %v255
    %v631 = vunpack.c.h.b16 %v255
    %v632 = vunpack.c.l.b16 %v256
    %v633 = vunpack.c.h.b16 %v256
    %v634 = vunpack.c.l.b16 %v257
    %v635 = vunpack.c.h.b16 %v257
    %v636 = vunpack.c.l.b16 %v258
    %v637 = vunpack.c.h.b16 %v258
    %v638 = vunpack.c.l.b16 %v259
    %v639 = vunpack.c.h.b16 %v259
    %v640 = vunpack.c.l.b16 %v260
    %v641 = vunpack.c.h.b16 %v260
    %v642 = vunpack.c.l.b16 %v261
    %v643 = vunpack.c.h.b16 %v261
    %v644 = vunpack.c.l.b16 %v262
    %v645 = vunpack.c.h.b16 %v262
    %v646 = vunpack.c.l.b16 %v263
    %v647 = vunpack.c.h.b16 %v263
    %v648 = vunpack.c.l.b16 %v264
    %v649 = vunpack.c.h.b16 %v264
    %v650 = vunpack.c.l.b16 %v265
    %v651 = vunpack.c.h.b16 %v265
    %v652 = vunpack.c.l.b16 %v266
    %v653 = vunpack.c.h.b16 %v266
    %v654 = vunpack.c.l.b16 %v267
    %v655 = vunpack.c.h.b16 %v267
    %v656 = vunpack.c.l.b16 %v268
    %v657 = vunpack.c.h.b16 %v268
    %v658 = vunpack.c.l.b16 %v269
    %v659 = vunpack.c.h.b16 %v269
    %v660 = vunpack.c.l.b16 %v270
    %v661 = vunpack.c.h.b16 %v270
    %v662 = vunpack.c.l.b16 %v271
    %v663 = vunpack.c.h.b16 %v271
    %v664 = vunpack.c.l.b16 %v272
    %v665 = vunpack.c.h.b16 %v272
    %v666 = vunpack.c.l.b16 %v273
    %v667 = vunpack.c.h.b16 %v273
    %v668 = vunpack.c.l.b16 %v274
    %v669 = vunpack.c.h.b16 %v274
    %v670 = vunpack.c.l.b16 %v275
    %v671 = vunpack.c.h.b16 %v275
    %v672 = vunpack.c.l.b16 %v276
    %v673 = vunpack.c.h.b16 %v276
    %v674 = vunpack.c.l.b16 %v277
    %v675 = vunpack.c.h.b16 %v277
    %v676 = vunpack.c.l.b16 %v278
    %v677 = vunpack.c.h.b16 %v278
    %v678 = vunpack.c.l.b16 %v279
    %v679 = vunpack.c.h.b16 %v279
    %v680 = vunpack.c.l.b16 %v280
    %v681 = vunpack.c.h.b16 %v280
    %v682 = vunpack.c.l.b16 %v281
    %v683 = vunpack.c.h.b16 %v281
    %v684 = vunpack.c.l.b16 %v282
    %v685 = vunpack.c.h.b16 %v282
    %v686 = vunpack.c.l.b16 %v283
    %v687 = vunpack.c.h.b16 %v283
    %v688 = vunpack.c.l.b16 %v284
    %v689 = vunpack.c.h.b16 %v284
    %v690 = vunpack.c.l.b16 %v285
    %v691 = vunpack.c.h.b16 %v285
    %v692 = vpack.c.b16 %v440, %v436
    %v693 = vpack.c.b16 %v441, %v437
    %v694 = vpack.c.b16 %v442, %v438
    %v695 = vpack.c.b16 %v443, %v439
    %v696 = vpack.c.b16 %v448, %v444
    %v697 = vpack.c.b16 %v449, %v445
    %v698 = vpack.c.b16 %v450, %v446
    %v699 = vpack.c.b16 %v451, %v447
    %v700 = vpack.c.b16 %v456, %v452
    %v701 = vpack.c.b16 %v457, %v453
    %v702 = vpack.c.b16 %v458, %v454
    %v703 = vpack.c.b16 %v459, %v455
    %v704 = vpack.c.b16 %v464, %v460
    %v705 = vpack.c.b16 %v465, %v461
    %v706 = vpack.c.b16 %v466, %v462
    %v707 = vpack.c.b16 %v467, %v463
    %v708 = vpack.c.b16 %v472, %v468
    %v709 = vpack.c.b16 %v473, %v469
    %v710 = vpack.c.b16 %v474, %v470
    %v711 = vpack.c.b16 %v475, %v471
    %v712 = vpack.c.b16 %v480, %v476
    %v713 = vpack.c.b16 %v481, %v477
    %v714 = vpack.c.b16 %v482, %v478
    %v715 = vpack.c.b16 %v483, %v479
    %v716 = vpack.c.b16 %v488, %v484
    %v717 = vpack.c.b16 %v489, %v485
    %v718 = vpack.c.b16 %v490, %v486
    %v719 = vpack.c.b16 %v491, %v487
    %v720 = vpack.c.b16 %v496, %v492
    %v721 = vpack.c.b16 %v497, %v493
    %v722 = vpack.c.b16 %v498, %v494
    %v723 = vpack.c.b16 %v499, %v495
    %v724 = vpack.c.b16 %v504, %v500
    %v725 = vpack.c.b16 %v505, %v501
    %v726 = vpack.c.b16 %v506, %v502
    %v727 = vpack.c.b16 %v507, %v503
    %v728 = vpack.c.b16 %v512, %v508
    %v729 = vpack.c.b16 %v513, %v509
    %v730 = vpack.c.b16 %v514, %v510
    %v731 = vpack.c.b16 %v515, %v511
    %v732 = vpack.c.b16 %v520, %v516
    %v733 = vpack.c.b16 %v521, %v517
    %v734 = vpack.c.b16 %v522, %v518
    %v735 = vpack.c.b16 %v523, %v519
    %v736 = vpack.c.b16 %v528, %v524
    %v737 = vpack.c.b16 %v529, %v525
    %v738 = vpack.c.b16 %v530, %v526
    %v739 = vpack.c.b16 %v531, %v527
    %v740 = vpack.c.b16 %v536, %v532
    %v741 = vpack.c.b16 %v537, %v533
    %v742 = vpack.c.b16 %v538, %v534
    %v743 = vpack.c.b16 %v539, %v535
    %v744 = vpack.c.b16 %v544, %v540
    %v745 = vpack.c.b16 %v545, %v541
    %v746 = vpack.c.b16 %v546, %v542
    %v747 = vpack.c.b16 %v547, %v543
    %v748 = vpack.c.b16 %v552, %v548
    %v749 = vpack.c.b16 %v553, %v549
    %v750 = vpack.c.b16 %v554, %v550
    %v751 = vpack.c.b16 %v555, %v551
    %v752 = vpack.c.b16 %v560, %v556
    %v753 = vpack.c.b16 %v561, %v557
    %v754 = vpack.c.b16 %v562, %v558
    %v755 = vpack.c.b16 %v563, %v559
    %v756 = vpack.c.b16 %v568, %v564
    %v757 = vpack.c.b16 %v569, %v565
    %v758 = vpack.c.b16 %v570, %v566
    %v759 = vpack.c.b16 %v571, %v567
    %v760 = vpack.c.b16 %v576, %v572
    %v761 = vpack.c.b16 %v577, %v573
    %v762 = vpack.c.b16 %v578, %v574
    %v763 = vpack.c.b16 %v579, %v575
    %v764 = vpack.c.b16 %v584, %v580
    %v765 = vpack.c.b16 %v585, %v581
    %v766 = vpack.c.b16 %v586, %v582
    %v767 = vpack.c.b16 %v587, %v583
    %v768 = vpack.c.b16 %v592, %v588
    %v769 = vpack.c.b16 %v593, %v589
    %v770 = vpack.c.b16 %v594, %v590
    %v771 = vpack.c.b16 %v595, %v591
    %v772 = vpack.c.b16 %v600, %v596
    %v773 = vpack.c.b16 %v601, %v597
    %v774 = vpack.c.b16 %v602, %v598
    %v775 = vpack.c.b16 %v603, %v599
    %v776 = vpack.c.b16 %v608, %v604
    %v777 = vpack.c.b16 %v609, %v605
    %v778 = vpack.c.b16 %v610, %v606
    %v779 = vpack.c.b16 %v611, %v607
    %v780 = vpack.c.b16 %v616, %v612
    %v781 = vpack.c.b16 %v617, %v613
    %v782 = vpack.c.b16 %v618, %v614
    %v783 = vpack.c.b16 %v619, %v615
    %v784 = vpack.c.b16 %v624, %v620
    %v785 = vpack.c.b16 %v625, %v621
    %v786 = vpack.c.b16 %v626, %v622
    %v787 = vpack.c.b16 %v627, %v623
    %v788 = vpack.c.b16 %v632, %v628
    %v789 = vpack.c.b16 %v633, %v629
    %v790 = vpack.c.b16 %v634, %v630
    %v791 = vpack.c.b16 %v635, %v631
    %v792 = vpack.c.b16 %v640, %v636
    %v793 = vpack.c.b16 %v641, %v637
    %v794 = vpack.c.b16 %v642, %v638
    %v795 = vpack.c.b16 %v643, %v639
    %v796 = vpack.c.b16 %v648, %v644
    %v797 = vpack.c.b16 %v649, %v645
    %v798 = vpack.c.b16 %v650, %v646
    %v799 = vpack.c.b16 %v651, %v647
    %v800 = vpack.c.b16 %v656, %v652
    %v801 = vpack.c.b16 %v657, %v653
    %v802 = vpack.c.b16 %v658, %v654
    %v803 = vpack.c.b16 %v659, %v655
    %v804 = vpack.c.b16 %v664, %v660
    %v805 = vpack.c.b16 %v665, %v661
    %v806 = vpack.c.b16 %v666, %v662
    %v807 = vpack.c.b16 %v667, %v663
    %v808 = vpack.c.b16 %v672, %v668
    %v809 = vpack.c.b16 %v673, %v669
    %v810 = vpack.c.b16 %v674, %v670
    %v811 = vpack.c.b16 %v675, %v671
    %v812 = vpack.c.b16 %v680, %v676
    %v813 = vpack.c.b16 %v681, %v677
    %v814 = vpack.c.b16 %v682, %v678
    %v815 = vpack.c.b16 %v683, %v679
    %v816 = vpack.c.b16 %v688, %v684
    %v817 = vpack.c.b16 %v689, %v685
    %v818 = vpack.c.b16 %v690, %v686
    %v819 = vpack.c.b16 %v691, %v687
    %948 = vmatprep.subr.bf16.mxu0 %v721
    %949 = vmatpush1.bf16.msra.mxu0 %v720
    %950 = vmatprep.subr.bf16.mxu0 %v717
    %951 = vmatpush1.bf16.msra.mxu0 %v716
    %952 = vmatprep.subr.bf16.mxu0 %v713
    %953 = vmatpush1.bf16.msra.mxu0 %v712
    %954 = vmatprep.subr.bf16.mxu0 %v709
    %955 = vmatpush1.bf16.msra.mxu0 %v708
    %956 = vmatprep.subr.bf16.mxu0 %v705
    %957 = vmatpush1.bf16.msra.mxu0 %v704
    %958 = vmatprep.subr.bf16.mxu0 %v701
    %959 = vmatpush1.bf16.msra.mxu0 %v700
    %960 = vmatprep.subr.bf16.mxu0 %v697
    %961 = vmatpush1.bf16.msra.mxu0 %v696
    %962 = vmatprep.subr.bf16.mxu0 %v693
    %963 = vmatpush1.bf16.msra.mxu0 %v692
    %964 = vmatprep.subr.bf16.mxu0 %v753
    %965 = vmatpush2.bf16.msra.mxu0 %v752
    %966 = vmatprep.subr.bf16.mxu0 %v749
    %967 = vmatpush2.bf16.msra.mxu0 %v748
    %968 = vmatprep.subr.bf16.mxu0 %v745
    %969 = vmatpush2.bf16.msra.mxu0 %v744
    %970 = vmatprep.subr.bf16.mxu0 %v741
    %971 = vmatpush2.bf16.msra.mxu0 %v740
    %972 = vmatprep.subr.bf16.mxu0 %v737
    %973 = vmatpush2.bf16.msra.mxu0 %v736
    %974 = vmatprep.subr.bf16.mxu0 %v733
    %975 = vmatpush2.bf16.msra.mxu0 %v732
    %976 = vmatprep.subr.bf16.mxu0 %v729
    %977 = vmatpush2.bf16.msra.mxu0 %v728
    %978 = vmatprep.subr.bf16.mxu0 %v725
    %979 = vmatpush2.bf16.msra.mxu0 %v724
    %980 = vmatprep.mubr.bf16.mxu0 %v155
    %981 = vmatmul.mubr.bf16.gmra.mxu0 %v154
    %v982 = vpop.f32.mrf.mxu0
    %v983 = vadd.f32 %v291, %v982
    %v984 = vpop.f32.mrf.mxu0
    %v985 = vadd.f32 %v295, %v984
    %v986 = vpop.f32.mrf.mxu0
    %v987 = vpop.f32.mrf.mxu0
    %988 = vdwg.mxu0
    %989 = vmatprep.subr.bf16.mxu0 %v785
    %990 = vmatpush1.bf16.msra.mxu0 %v784
    %991 = vmatprep.subr.bf16.mxu0 %v781
    %992 = vmatpush1.bf16.msra.mxu0 %v780
    %993 = vmatprep.subr.bf16.mxu0 %v777
    %994 = vmatpush1.bf16.msra.mxu0 %v776
    %995 = vmatprep.subr.bf16.mxu0 %v773
    %996 = vmatpush1.bf16.msra.mxu0 %v772
    %997 = vmatprep.subr.bf16.mxu0 %v769
    %998 = vmatpush1.bf16.msra.mxu0 %v768
    %999 = vmatprep.subr.bf16.mxu0 %v765
    %1000 = vmatpush1.bf16.msra.mxu0 %v764
    %1001 = vmatprep.subr.bf16.mxu0 %v761
    %1002 = vmatpush1.bf16.msra.mxu0 %v760
    %1003 = vmatprep.subr.bf16.mxu0 %v757
    %1004 = vmatpush1.bf16.msra.mxu0 %v756
    %1005 = vmatprep.subr.bf16.mxu0 %v817
    %1006 = vmatpush2.bf16.msra.mxu0 %v816
    %1007 = vmatprep.subr.bf16.mxu0 %v813
    %1008 = vmatpush2.bf16.msra.mxu0 %v812
    %1009 = vmatprep.subr.bf16.mxu0 %v809
    %1010 = vmatpush2.bf16.msra.mxu0 %v808
    %1011 = vmatprep.subr.bf16.mxu0 %v805
    %1012 = vmatpush2.bf16.msra.mxu0 %v804
    %1013 = vmatprep.subr.bf16.mxu0 %v801
    %1014 = vmatpush2.bf16.msra.mxu0 %v800
    %1015 = vmatprep.subr.bf16.mxu0 %v797
    %1016 = vmatpush2.bf16.msra.mxu0 %v796
    %1017 = vmatprep.subr.bf16.mxu0 %v793
    %1018 = vmatpush2.bf16.msra.mxu0 %v792
    %1019 = vmatprep.subr.bf16.mxu0 %v789
    %1020 = vmatpush2.bf16.msra.mxu0 %v788
    %1021 = vmatprep.mubr.bf16.mxu0 %v157
    %1022 = vmatmul.mubr.bf16.gmra.mxu0 %v156
    %v1023 = vpop.f32.mrf.mxu0
    %v1024 = vadd.f32 %v983, %v1023
    %v1025 = vpop.f32.mrf.mxu0
    %v1026 = vadd.f32 %v985, %v1025
    %v1027 = vpop.f32.mrf.mxu0
    %v1028 = vpop.f32.mrf.mxu0
    %1029 = vdwg.mxu0
    %1030 = vmatprep.subr.bf16.mxu0 %v723
    %1031 = vmatpush1.bf16.msra.mxu0 %v722
    %1032 = vmatprep.subr.bf16.mxu0 %v719
    %1033 = vmatpush1.bf16.msra.mxu0 %v718
    %1034 = vmatprep.subr.bf16.mxu0 %v715
    %1035 = vmatpush1.bf16.msra.mxu0 %v714
    %1036 = vmatprep.subr.bf16.mxu0 %v711
    %1037 = vmatpush1.bf16.msra.mxu0 %v710
    %1038 = vmatprep.subr.bf16.mxu0 %v707
    %1039 = vmatpush1.bf16.msra.mxu0 %v706
    %1040 = vmatprep.subr.bf16.mxu0 %v703
    %1041 = vmatpush1.bf16.msra.mxu0 %v702
    %1042 = vmatprep.subr.bf16.mxu0 %v699
    %1043 = vmatpush1.bf16.msra.mxu0 %v698
    %1044 = vmatprep.subr.bf16.mxu0 %v695
    %1045 = vmatpush1.bf16.msra.mxu0 %v694
    %1046 = vmatprep.subr.bf16.mxu0 %v755
    %1047 = vmatpush2.bf16.msra.mxu0 %v754
    %1048 = vmatprep.subr.bf16.mxu0 %v751
    %1049 = vmatpush2.bf16.msra.mxu0 %v750
    %1050 = vmatprep.subr.bf16.mxu0 %v747
    %1051 = vmatpush2.bf16.msra.mxu0 %v746
    %1052 = vmatprep.subr.bf16.mxu0 %v743
    %1053 = vmatpush2.bf16.msra.mxu0 %v742
    %1054 = vmatprep.subr.bf16.mxu0 %v739
    %1055 = vmatpush2.bf16.msra.mxu0 %v738
    %1056 = vmatprep.subr.bf16.mxu0 %v735
    %1057 = vmatpush2.bf16.msra.mxu0 %v734
    %1058 = vmatprep.subr.bf16.mxu0 %v731
    %1059 = vmatpush2.bf16.msra.mxu0 %v730
    %1060 = vmatprep.subr.bf16.mxu0 %v727
    %1061 = vmatpush2.bf16.msra.mxu0 %v726
    %1062 = vmatprep.mubr.bf16.mxu0 %v155
    %1063 = vmatmul.mubr.bf16.gmra.mxu0 %v154
    %v1064 = vpop.f32.mrf.mxu0
    %v1065 = vadd.f32 %v299, %v1064
    %v1066 = vpop.f32.mrf.mxu0
    %v1067 = vadd.f32 %v303, %v1066
    %v1068 = vpop.f32.mrf.mxu0
    %v1069 = vpop.f32.mrf.mxu0
    %1070 = vdwg.mxu0
    %1071 = vmatprep.subr.bf16.mxu0 %v787
    %1072 = vmatpush1.bf16.msra.mxu0 %v786
    %1073 = vmatprep.subr.bf16.mxu0 %v783
    %1074 = vmatpush1.bf16.msra.mxu0 %v782
    %1075 = vmatprep.subr.bf16.mxu0 %v779
    %1076 = vmatpush1.bf16.msra.mxu0 %v778
    %1077 = vmatprep.subr.bf16.mxu0 %v775
    %1078 = vmatpush1.bf16.msra.mxu0 %v774
    %1079 = vmatprep.subr.bf16.mxu0 %v771
    %1080 = vmatpush1.bf16.msra.mxu0 %v770
    %1081 = vmatprep.subr.bf16.mxu0 %v767
    %1082 = vmatpush1.bf16.msra.mxu0 %v766
    %1083 = vmatprep.subr.bf16.mxu0 %v763
    %1084 = vmatpush1.bf16.msra.mxu0 %v762
    %1085 = vmatprep.subr.bf16.mxu0 %v759
    %1086 = vmatpush1.bf16.msra.mxu0 %v758
    %1087 = vmatprep.subr.bf16.mxu0 %v819
    %1088 = vmatpush2.bf16.msra.mxu0 %v818
    %1089 = vmatprep.subr.bf16.mxu0 %v815
    %1090 = vmatpush2.bf16.msra.mxu0 %v814
    %1091 = vmatprep.subr.bf16.mxu0 %v811
    %1092 = vmatpush2.bf16.msra.mxu0 %v810
    %1093 = vmatprep.subr.bf16.mxu0 %v807
    %1094 = vmatpush2.bf16.msra.mxu0 %v806
    %1095 = vmatprep.subr.bf16.mxu0 %v803
    %1096 = vmatpush2.bf16.msra.mxu0 %v802
    %1097 = vmatprep.subr.bf16.mxu0 %v799
    %1098 = vmatpush2.bf16.msra.mxu0 %v798
    %1099 = vmatprep.subr.bf16.mxu0 %v795
    %1100 = vmatpush2.bf16.msra.mxu0 %v794
    %1101 = vmatprep.subr.bf16.mxu0 %v791
    %1102 = vmatpush2.bf16.msra.mxu0 %v790
    %1103 = vmatprep.mubr.bf16.mxu0 %v157
    %1104 = vmatmul.mubr.bf16.gmra.mxu0 %v156
    %v1105 = vpop.f32.mrf.mxu0
    %v1106 = vadd.f32 %v1065, %v1105
    %v1107 = vpop.f32.mrf.mxu0
    %v1108 = vadd.f32 %v1067, %v1107
    %v1109 = vpop.f32.mrf.mxu0
    %v1110 = vpop.f32.mrf.mxu0
    %1111 = vdwg.mxu0
    %v1112 = vmax.f32 %v1024, 0.0
    %v1113 = vmax.f32 %v1026, 0.0
    %v1114 = vmax.f32 %v1106, 0.0
    %v1115 = vmax.f32 %v1108, 0.0
    %v1116 = vpack.c.bf16 %v1112, %v1112
    %v1117 = vpack.c.bf16 %v1113, %v1113
    %v1118 = vpack.c.bf16 %v1114, %v1114
    %v1119 = vpack.c.bf16 %v1115, %v1115
    %v1120 = vld [vmem:[#allocation8] sm:$0xff]
    %v1121 = vld [vmem:[#allocation8 + $0x8] sm:$0xff]
    %v1122 = vld [vmem:[#allocation8 + $0x10] sm:$0xff]
    %v1123 = vld [vmem:[#allocation8 + $0x18] sm:$0xff]
    %v1124 = vld [vmem:[#allocation8 + $0x20] sm:$0xff]
    %v1125 = vld [vmem:[#allocation8 + $0x28] sm:$0xff]
    %v1126 = vld [vmem:[#allocation8 + $0x30] sm:$0xff]
    %v1127 = vld [vmem:[#allocation8 + $0x38] sm:$0xff]
    %v1128 = vld [vmem:[#allocation8 + $0x40] sm:$0xff]
    %v1129 = vld [vmem:[#allocation8 + $0x48] sm:$0xff]
    %v1130 = vld [vmem:[#allocation8 + $0x50] sm:$0xff]
    %v1131 = vld [vmem:[#allocation8 + $0x58] sm:$0xff]
    %v1132 = vld [vmem:[#allocation8 + $0x60] sm:$0xff]
    %v1133 = vld [vmem:[#allocation8 + $0x68] sm:$0xff]
    %v1134 = vld [vmem:[#allocation8 + $0x70] sm:$0xff]
    %v1135 = vld [vmem:[#allocation8 + $0x78] sm:$0xff]
    %v1136 = vld [vmem:[#allocation8 + $0x80] sm:$0xff]
    %v1137 = vld [vmem:[#allocation8 + $0x88] sm:$0xff]
    %v1138 = vld [vmem:[#allocation8 + $0x90] sm:$0xff]
    %v1139 = vld [vmem:[#allocation8 + $0x98] sm:$0xff]
    %v1140 = vld [vmem:[#allocation8 + $0xa0] sm:$0xff]
    %v1141 = vld [vmem:[#allocation8 + $0xa8] sm:$0xff]
    %v1142 = vld [vmem:[#allocation8 + $0xb0] sm:$0xff]
    %v1143 = vld [vmem:[#allocation8 + $0xb8] sm:$0xff]
    %v1144 = vld [vmem:[#allocation8 + $0xc0] sm:$0xff]
    %v1145 = vld [vmem:[#allocation8 + $0xc8] sm:$0xff]
    %v1146 = vld [vmem:[#allocation8 + $0xd0] sm:$0xff]
    %v1147 = vld [vmem:[#allocation8 + $0xd8] sm:$0xff]
    %v1148 = vld [vmem:[#allocation8 + $0xe0] sm:$0xff]
    %v1149 = vld [vmem:[#allocation8 + $0xe8] sm:$0xff]
    %v1150 = vld [vmem:[#allocation8 + $0xf0] sm:$0xff]
    %v1151 = vld [vmem:[#allocation8 + $0xf8] sm:$0xff]
    %v1152 = vld [vmem:[#allocation8 + $0x100] sm:$0xff]
    %v1153 = vld [vmem:[#allocation8 + $0x108] sm:$0xff]
    %v1154 = vld [vmem:[#allocation8 + $0x110] sm:$0xff]
    %v1155 = vld [vmem:[#allocation8 + $0x118] sm:$0xff]
    %v1156 = vld [vmem:[#allocation8 + $0x120] sm:$0xff]
    %v1157 = vld [vmem:[#allocation8 + $0x128] sm:$0xff]
    %v1158 = vld [vmem:[#allocation8 + $0x130] sm:$0xff]
    %v1159 = vld [vmem:[#allocation8 + $0x138] sm:$0xff]
    %v1160 = vld [vmem:[#allocation8 + $0x140] sm:$0xff]
    %v1161 = vld [vmem:[#allocation8 + $0x148] sm:$0xff]
    %v1162 = vld [vmem:[#allocation8 + $0x150] sm:$0xff]
    %v1163 = vld [vmem:[#allocation8 + $0x158] sm:$0xff]
    %v1164 = vld [vmem:[#allocation8 + $0x160] sm:$0xff]
    %v1165 = vld [vmem:[#allocation8 + $0x168] sm:$0xff]
    %v1166 = vld [vmem:[#allocation8 + $0x170] sm:$0xff]
    %v1167 = vld [vmem:[#allocation8 + $0x178] sm:$0xff]
    %v1168 = vld [vmem:[#allocation8 + $0x180] sm:$0xff]
    %v1169 = vld [vmem:[#allocation8 + $0x188] sm:$0xff]
    %v1170 = vld [vmem:[#allocation8 + $0x190] sm:$0xff]
    %v1171 = vld [vmem:[#allocation8 + $0x198] sm:$0xff]
    %v1172 = vld [vmem:[#allocation8 + $0x1a0] sm:$0xff]
    %v1173 = vld [vmem:[#allocation8 + $0x1a8] sm:$0xff]
    %v1174 = vld [vmem:[#allocation8 + $0x1b0] sm:$0xff]
    %v1175 = vld [vmem:[#allocation8 + $0x1b8] sm:$0xff]
    %v1176 = vld [vmem:[#allocation8 + $0x1c0] sm:$0xff]
    %v1177 = vld [vmem:[#allocation8 + $0x1c8] sm:$0xff]
    %v1178 = vld [vmem:[#allocation8 + $0x1d0] sm:$0xff]
    %v1179 = vld [vmem:[#allocation8 + $0x1d8] sm:$0xff]
    %v1180 = vld [vmem:[#allocation8 + $0x1e0] sm:$0xff]
    %v1181 = vld [vmem:[#allocation8 + $0x1e8] sm:$0xff]
    %v1182 = vld [vmem:[#allocation8 + $0x1f0] sm:$0xff]
    %v1183 = vld [vmem:[#allocation8 + $0x1f8] sm:$0xff]
    %v1184 = vld [vmem:[#allocation8 + $0x200] sm:$0xff]
    %v1185 = vld [vmem:[#allocation8 + $0x208] sm:$0xff]
    %v1186 = vld [vmem:[#allocation8 + $0x210] sm:$0xff]
    %v1187 = vld [vmem:[#allocation8 + $0x218] sm:$0xff]
    %v1188 = vld [vmem:[#allocation8 + $0x220] sm:$0xff]
    %v1189 = vld [vmem:[#allocation8 + $0x228] sm:$0xff]
    %v1190 = vld [vmem:[#allocation8 + $0x230] sm:$0xff]
    %v1191 = vld [vmem:[#allocation8 + $0x238] sm:$0xff]
    %v1192 = vld [vmem:[#allocation8 + $0x240] sm:$0xff]
    %v1193 = vld [vmem:[#allocation8 + $0x248] sm:$0xff]
    %v1194 = vld [vmem:[#allocation8 + $0x250] sm:$0xff]
    %v1195 = vld [vmem:[#allocation8 + $0x258] sm:$0xff]
    %v1196 = vld [vmem:[#allocation8 + $0x260] sm:$0xff]
    %v1197 = vld [vmem:[#allocation8 + $0x268] sm:$0xff]
    %v1198 = vld [vmem:[#allocation8 + $0x270] sm:$0xff]
    %v1199 = vld [vmem:[#allocation8 + $0x278] sm:$0xff]
    %v1200 = vld [vmem:[#allocation8 + $0x280] sm:$0xff]
    %v1201 = vld [vmem:[#allocation8 + $0x288] sm:$0xff]
    %v1202 = vld [vmem:[#allocation8 + $0x290] sm:$0xff]
    %v1203 = vld [vmem:[#allocation8 + $0x298] sm:$0xff]
    %v1204 = vld [vmem:[#allocation8 + $0x2a0] sm:$0xff]
    %v1205 = vld [vmem:[#allocation8 + $0x2a8] sm:$0xff]
    %v1206 = vld [vmem:[#allocation8 + $0x2b0] sm:$0xff]
    %v1207 = vld [vmem:[#allocation8 + $0x2b8] sm:$0xff]
    %v1208 = vld [vmem:[#allocation8 + $0x2c0] sm:$0xff]
    %v1209 = vld [vmem:[#allocation8 + $0x2c8] sm:$0xff]
    %v1210 = vld [vmem:[#allocation8 + $0x2d0] sm:$0xff]
    %v1211 = vld [vmem:[#allocation8 + $0x2d8] sm:$0xff]
    %v1212 = vld [vmem:[#allocation8 + $0x2e0] sm:$0xff]
    %v1213 = vld [vmem:[#allocation8 + $0x2e8] sm:$0xff]
    %v1214 = vld [vmem:[#allocation8 + $0x2f0] sm:$0xff]
    %v1215 = vld [vmem:[#allocation8 + $0x2f8] sm:$0xff]
    %v1216 = vld [vmem:[#allocation8 + $0x300] sm:$0xff]
    %v1217 = vld [vmem:[#allocation8 + $0x308] sm:$0xff]
    %v1218 = vld [vmem:[#allocation8 + $0x310] sm:$0xff]
    %v1219 = vld [vmem:[#allocation8 + $0x318] sm:$0xff]
    %v1220 = vld [vmem:[#allocation8 + $0x320] sm:$0xff]
    %v1221 = vld [vmem:[#allocation8 + $0x328] sm:$0xff]
    %v1222 = vld [vmem:[#allocation8 + $0x330] sm:$0xff]
    %v1223 = vld [vmem:[#allocation8 + $0x338] sm:$0xff]
    %v1224 = vld [vmem:[#allocation8 + $0x340] sm:$0xff]
    %v1225 = vld [vmem:[#allocation8 + $0x348] sm:$0xff]
    %v1226 = vld [vmem:[#allocation8 + $0x350] sm:$0xff]
    %v1227 = vld [vmem:[#allocation8 + $0x358] sm:$0xff]
    %v1228 = vld [vmem:[#allocation8 + $0x360] sm:$0xff]
    %v1229 = vld [vmem:[#allocation8 + $0x368] sm:$0xff]
    %v1230 = vld [vmem:[#allocation8 + $0x370] sm:$0xff]
    %v1231 = vld [vmem:[#allocation8 + $0x378] sm:$0xff]
    %v1232 = vld [vmem:[#allocation8 + $0x380] sm:$0xff]
    %v1233 = vld [vmem:[#allocation8 + $0x388] sm:$0xff]
    %v1234 = vld [vmem:[#allocation8 + $0x390] sm:$0xff]
    %v1235 = vld [vmem:[#allocation8 + $0x398] sm:$0xff]
    %v1236 = vld [vmem:[#allocation8 + $0x3a0] sm:$0xff]
    %v1237 = vld [vmem:[#allocation8 + $0x3a8] sm:$0xff]
    %v1238 = vld [vmem:[#allocation8 + $0x3b0] sm:$0xff]
    %v1239 = vld [vmem:[#allocation8 + $0x3b8] sm:$0xff]
    %v1240 = vld [vmem:[#allocation8 + $0x3c0] sm:$0xff]
    %v1241 = vld [vmem:[#allocation8 + $0x3c8] sm:$0xff]
    %v1242 = vld [vmem:[#allocation8 + $0x3d0] sm:$0xff]
    %v1243 = vld [vmem:[#allocation8 + $0x3d8] sm:$0xff]
    %v1244 = vld [vmem:[#allocation8 + $0x3e0] sm:$0xff]
    %v1245 = vld [vmem:[#allocation8 + $0x3e8] sm:$0xff]
    %v1246 = vld [vmem:[#allocation8 + $0x3f0] sm:$0xff]
    %v1247 = vld [vmem:[#allocation8 + $0x3f8] sm:$0xff]
    %v1248 = vld [vmem:[#allocation10] sm:$0xf]
    %v1250 = vlaneseq
    %v1251 = vshrl.u32 %v1250, 7
    %v1252 = vsub.s32 0, %v1251
    %v1253 = vrot.slane %v1248, %v1252
    %v1254 = vlaneseq
    %v1255 = vshrl.u32 %v1254, 7
    %v1256 = vsub.s32 1, %v1255
    %v1257 = vrot.slane %v1248, %v1256
    %v1258 = vlaneseq
    %v1259 = vshrl.u32 %v1258, 7
    %v1260 = vsub.s32 2, %v1259
    %v1261 = vrot.slane %v1248, %v1260
    %v1262 = vlaneseq
    %v1263 = vshrl.u32 %v1262, 7
    %v1264 = vsub.s32 3, %v1263
    %v1265 = vrot.slane %v1248, %v1264
    %v1398 = vunpack.c.l.b16 %v1120
    %v1399 = vunpack.c.h.b16 %v1120
    %v1400 = vunpack.c.l.b16 %v1121
    %v1401 = vunpack.c.h.b16 %v1121
    %v1402 = vunpack.c.l.b16 %v1122
    %v1403 = vunpack.c.h.b16 %v1122
    %v1404 = vunpack.c.l.b16 %v1123
    %v1405 = vunpack.c.h.b16 %v1123
    %v1406 = vunpack.c.l.b16 %v1124
    %v1407 = vunpack.c.h.b16 %v1124
    %v1408 = vunpack.c.l.b16 %v1125
    %v1409 = vunpack.c.h.b16 %v1125
    %v1410 = vunpack.c.l.b16 %v1126
    %v1411 = vunpack.c.h.b16 %v1126
    %v1412 = vunpack.c.l.b16 %v1127
    %v1413 = vunpack.c.h.b16 %v1127
    %v1414 = vunpack.c.l.b16 %v1128
    %v1415 = vunpack.c.h.b16 %v1128
    %v1416 = vunpack.c.l.b16 %v1129
    %v1417 = vunpack.c.h.b16 %v1129
    %v1418 = vunpack.c.l.b16 %v1130
    %v1419 = vunpack.c.h.b16 %v1130
    %v1420 = vunpack.c.l.b16 %v1131
    %v1421 = vunpack.c.h.b16 %v1131
    %v1422 = vunpack.c.l.b16 %v1132
    %v1423 = vunpack.c.h.b16 %v1132
    %v1424 = vunpack.c.l.b16 %v1133
    %v1425 = vunpack.c.h.b16 %v1133
    %v1426 = vunpack.c.l.b16 %v1134
    %v1427 = vunpack.c.h.b16 %v1134
    %v1428 = vunpack.c.l.b16 %v1135
    %v1429 = vunpack.c.h.b16 %v1135
    %v1430 = vunpack.c.l.b16 %v1136
    %v1431 = vunpack.c.h.b16 %v1136
    %v1432 = vunpack.c.l.b16 %v1137
    %v1433 = vunpack.c.h.b16 %v1137
    %v1434 = vunpack.c.l.b16 %v1138
    %v1435 = vunpack.c.h.b16 %v1138
    %v1436 = vunpack.c.l.b16 %v1139
    %v1437 = vunpack.c.h.b16 %v1139
    %v1438 = vunpack.c.l.b16 %v1140
    %v1439 = vunpack.c.h.b16 %v1140
    %v1440 = vunpack.c.l.b16 %v1141
    %v1441 = vunpack.c.h.b16 %v1141
    %v1442 = vunpack.c.l.b16 %v1142
    %v1443 = vunpack.c.h.b16 %v1142
    %v1444 = vunpack.c.l.b16 %v1143
    %v1445 = vunpack.c.h.b16 %v1143
    %v1446 = vunpack.c.l.b16 %v1144
    %v1447 = vunpack.c.h.b16 %v1144
    %v1448 = vunpack.c.l.b16 %v1145
    %v1449 = vunpack.c.h.b16 %v1145
    %v1450 = vunpack.c.l.b16 %v1146
    %v1451 = vunpack.c.h.b16 %v1146
    %v1452 = vunpack.c.l.b16 %v1147
    %v1453 = vunpack.c.h.b16 %v1147
    %v1454 = vunpack.c.l.b16 %v1148
    %v1455 = vunpack.c.h.b16 %v1148
    %v1456 = vunpack.c.l.b16 %v1149
    %v1457 = vunpack.c.h.b16 %v1149
    %v1458 = vunpack.c.l.b16 %v1150
    %v1459 = vunpack.c.h.b16 %v1150
    %v1460 = vunpack.c.l.b16 %v1151
    %v1461 = vunpack.c.h.b16 %v1151
    %v1462 = vunpack.c.l.b16 %v1152
    %v1463 = vunpack.c.h.b16 %v1152
    %v1464 = vunpack.c.l.b16 %v1153
    %v1465 = vunpack.c.h.b16 %v1153
    %v1466 = vunpack.c.l.b16 %v1154
    %v1467 = vunpack.c.h.b16 %v1154
    %v1468 = vunpack.c.l.b16 %v1155
    %v1469 = vunpack.c.h.b16 %v1155
    %v1470 = vunpack.c.l.b16 %v1156
    %v1471 = vunpack.c.h.b16 %v1156
    %v1472 = vunpack.c.l.b16 %v1157
    %v1473 = vunpack.c.h.b16 %v1157
    %v1474 = vunpack.c.l.b16 %v1158
    %v1475 = vunpack.c.h.b16 %v1158
    %v1476 = vunpack.c.l.b16 %v1159
    %v1477 = vunpack.c.h.b16 %v1159
    %v1478 = vunpack.c.l.b16 %v1160
    %v1479 = vunpack.c.h.b16 %v1160
    %v1480 = vunpack.c.l.b16 %v1161
    %v1481 = vunpack.c.h.b16 %v1161
    %v1482 = vunpack.c.l.b16 %v1162
    %v1483 = vunpack.c.h.b16 %v1162
    %v1484 = vunpack.c.l.b16 %v1163
    %v1485 = vunpack.c.h.b16 %v1163
    %v1486 = vunpack.c.l.b16 %v1164
    %v1487 = vunpack.c.h.b16 %v1164
    %v1488 = vunpack.c.l.b16 %v1165
    %v1489 = vunpack.c.h.b16 %v1165
    %v1490 = vunpack.c.l.b16 %v1166
    %v1491 = vunpack.c.h.b16 %v1166
    %v1492 = vunpack.c.l.b16 %v1167
    %v1493 = vunpack.c.h.b16 %v1167
    %v1494 = vunpack.c.l.b16 %v1168
    %v1495 = vunpack.c.h.b16 %v1168
    %v1496 = vunpack.c.l.b16 %v1169
    %v1497 = vunpack.c.h.b16 %v1169
    %v1498 = vunpack.c.l.b16 %v1170
    %v1499 = vunpack.c.h.b16 %v1170
    %v1500 = vunpack.c.l.b16 %v1171
    %v1501 = vunpack.c.h.b16 %v1171
    %v1502 = vunpack.c.l.b16 %v1172
    %v1503 = vunpack.c.h.b16 %v1172
    %v1504 = vunpack.c.l.b16 %v1173
    %v1505 = vunpack.c.h.b16 %v1173
    %v1506 = vunpack.c.l.b16 %v1174
    %v1507 = vunpack.c.h.b16 %v1174
    %v1508 = vunpack.c.l.b16 %v1175
    %v1509 = vunpack.c.h.b16 %v1175
    %v1510 = vunpack.c.l.b16 %v1176
    %v1511 = vunpack.c.h.b16 %v1176
    %v1512 = vunpack.c.l.b16 %v1177
    %v1513 = vunpack.c.h.b16 %v1177
    %v1514 = vunpack.c.l.b16 %v1178
    %v1515 = vunpack.c.h.b16 %v1178
    %v1516 = vunpack.c.l.b16 %v1179
    %v1517 = vunpack.c.h.b16 %v1179
    %v1518 = vunpack.c.l.b16 %v1180
    %v1519 = vunpack.c.h.b16 %v1180
    %v1520 = vunpack.c.l.b16 %v1181
    %v1521 = vunpack.c.h.b16 %v1181
    %v1522 = vunpack.c.l.b16 %v1182
    %v1523 = vunpack.c.h.b16 %v1182
    %v1524 = vunpack.c.l.b16 %v1183
    %v1525 = vunpack.c.h.b16 %v1183
    %v1526 = vunpack.c.l.b16 %v1184
    %v1527 = vunpack.c.h.b16 %v1184
    %v1528 = vunpack.c.l.b16 %v1185
    %v1529 = vunpack.c.h.b16 %v1185
    %v1530 = vunpack.c.l.b16 %v1186
    %v1531 = vunpack.c.h.b16 %v1186
    %v1532 = vunpack.c.l.b16 %v1187
    %v1533 = vunpack.c.h.b16 %v1187
    %v1534 = vunpack.c.l.b16 %v1188
    %v1535 = vunpack.c.h.b16 %v1188
    %v1536 = vunpack.c.l.b16 %v1189
    %v1537 = vunpack.c.h.b16 %v1189
    %v1538 = vunpack.c.l.b16 %v1190
    %v1539 = vunpack.c.h.b16 %v1190
    %v1540 = vunpack.c.l.b16 %v1191
    %v1541 = vunpack.c.h.b16 %v1191
    %v1542 = vunpack.c.l.b16 %v1192
    %v1543 = vunpack.c.h.b16 %v1192
    %v1544 = vunpack.c.l.b16 %v1193
    %v1545 = vunpack.c.h.b16 %v1193
    %v1546 = vunpack.c.l.b16 %v1194
    %v1547 = vunpack.c.h.b16 %v1194
    %v1548 = vunpack.c.l.b16 %v1195
    %v1549 = vunpack.c.h.b16 %v1195
    %v1550 = vunpack.c.l.b16 %v1196
    %v1551 = vunpack.c.h.b16 %v1196
    %v1552 = vunpack.c.l.b16 %v1197
    %v1553 = vunpack.c.h.b16 %v1197
    %v1554 = vunpack.c.l.b16 %v1198
    %v1555 = vunpack.c.h.b16 %v1198
    %v1556 = vunpack.c.l.b16 %v1199
    %v1557 = vunpack.c.h.b16 %v1199
    %v1558 = vunpack.c.l.b16 %v1200
    %v1559 = vunpack.c.h.b16 %v1200
    %v1560 = vunpack.c.l.b16 %v1201
    %v1561 = vunpack.c.h.b16 %v1201
    %v1562 = vunpack.c.l.b16 %v1202
    %v1563 = vunpack.c.h.b16 %v1202
    %v1564 = vunpack.c.l.b16 %v1203
    %v1565 = vunpack.c.h.b16 %v1203
    %v1566 = vunpack.c.l.b16 %v1204
    %v1567 = vunpack.c.h.b16 %v1204
    %v1568 = vunpack.c.l.b16 %v1205
    %v1569 = vunpack.c.h.b16 %v1205
    %v1570 = vunpack.c.l.b16 %v1206
    %v1571 = vunpack.c.h.b16 %v1206
    %v1572 = vunpack.c.l.b16 %v1207
    %v1573 = vunpack.c.h.b16 %v1207
    %v1574 = vunpack.c.l.b16 %v1208
    %v1575 = vunpack.c.h.b16 %v1208
    %v1576 = vunpack.c.l.b16 %v1209
    %v1577 = vunpack.c.h.b16 %v1209
    %v1578 = vunpack.c.l.b16 %v1210
    %v1579 = vunpack.c.h.b16 %v1210
    %v1580 = vunpack.c.l.b16 %v1211
    %v1581 = vunpack.c.h.b16 %v1211
    %v1582 = vunpack.c.l.b16 %v1212
    %v1583 = vunpack.c.h.b16 %v1212
    %v1584 = vunpack.c.l.b16 %v1213
    %v1585 = vunpack.c.h.b16 %v1213
    %v1586 = vunpack.c.l.b16 %v1214
    %v1587 = vunpack.c.h.b16 %v1214
    %v1588 = vunpack.c.l.b16 %v1215
    %v1589 = vunpack.c.h.b16 %v1215
    %v1590 = vunpack.c.l.b16 %v1216
    %v1591 = vunpack.c.h.b16 %v1216
    %v1592 = vunpack.c.l.b16 %v1217
    %v1593 = vunpack.c.h.b16 %v1217
    %v1594 = vunpack.c.l.b16 %v1218
    %v1595 = vunpack.c.h.b16 %v1218
    %v1596 = vunpack.c.l.b16 %v1219
    %v1597 = vunpack.c.h.b16 %v1219
    %v1598 = vunpack.c.l.b16 %v1220
    %v1599 = vunpack.c.h.b16 %v1220
    %v1600 = vunpack.c.l.b16 %v1221
    %v1601 = vunpack.c.h.b16 %v1221
    %v1602 = vunpack.c.l.b16 %v1222
    %v1603 = vunpack.c.h.b16 %v1222
    %v1604 = vunpack.c.l.b16 %v1223
    %v1605 = vunpack.c.h.b16 %v1223
    %v1606 = vunpack.c.l.b16 %v1224
    %v1607 = vunpack.c.h.b16 %v1224
    %v1608 = vunpack.c.l.b16 %v1225
    %v1609 = vunpack.c.h.b16 %v1225
    %v1610 = vunpack.c.l.b16 %v1226
    %v1611 = vunpack.c.h.b16 %v1226
    %v1612 = vunpack.c.l.b16 %v1227
    %v1613 = vunpack.c.h.b16 %v1227
    %v1614 = vunpack.c.l.b16 %v1228
    %v1615 = vunpack.c.h.b16 %v1228
    %v1616 = vunpack.c.l.b16 %v1229
    %v1617 = vunpack.c.h.b16 %v1229
    %v1618 = vunpack.c.l.b16 %v1230
    %v1619 = vunpack.c.h.b16 %v1230
    %v1620 = vunpack.c.l.b16 %v1231
    %v1621 = vunpack.c.h.b16 %v1231
    %v1622 = vunpack.c.l.b16 %v1232
    %v1623 = vunpack.c.h.b16 %v1232
    %v1624 = vunpack.c.l.b16 %v1233
    %v1625 = vunpack.c.h.b16 %v1233
    %v1626 = vunpack.c.l.b16 %v1234
    %v1627 = vunpack.c.h.b16 %v1234
    %v1628 = vunpack.c.l.b16 %v1235
    %v1629 = vunpack.c.h.b16 %v1235
    %v1630 = vunpack.c.l.b16 %v1236
    %v1631 = vunpack.c.h.b16 %v1236
    %v1632 = vunpack.c.l.b16 %v1237
    %v1633 = vunpack.c.h.b16 %v1237
    %v1634 = vunpack.c.l.b16 %v1238
    %v1635 = vunpack.c.h.b16 %v1238
    %v1636 = vunpack.c.l.b16 %v1239
    %v1637 = vunpack.c.h.b16 %v1239
    %v1638 = vunpack.c.l.b16 %v1240
    %v1639 = vunpack.c.h.b16 %v1240
    %v1640 = vunpack.c.l.b16 %v1241
    %v1641 = vunpack.c.h.b16 %v1241
    %v1642 = vunpack.c.l.b16 %v1242
    %v1643 = vunpack.c.h.b16 %v1242
    %v1644 = vunpack.c.l.b16 %v1243
    %v1645 = vunpack.c.h.b16 %v1243
    %v1646 = vunpack.c.l.b16 %v1244
    %v1647 = vunpack.c.h.b16 %v1244
    %v1648 = vunpack.c.l.b16 %v1245
    %v1649 = vunpack.c.h.b16 %v1245
    %v1650 = vunpack.c.l.b16 %v1246
    %v1651 = vunpack.c.h.b16 %v1246
    %v1652 = vunpack.c.l.b16 %v1247
    %v1653 = vunpack.c.h.b16 %v1247
    %v1654 = vpack.c.b16 %v1402, %v1398
    %v1655 = vpack.c.b16 %v1403, %v1399
    %v1656 = vpack.c.b16 %v1404, %v1400
    %v1657 = vpack.c.b16 %v1405, %v1401
    %v1658 = vpack.c.b16 %v1410, %v1406
    %v1659 = vpack.c.b16 %v1411, %v1407
    %v1660 = vpack.c.b16 %v1412, %v1408
    %v1661 = vpack.c.b16 %v1413, %v1409
    %v1662 = vpack.c.b16 %v1418, %v1414
    %v1663 = vpack.c.b16 %v1419, %v1415
    %v1664 = vpack.c.b16 %v1420, %v1416
    %v1665 = vpack.c.b16 %v1421, %v1417
    %v1666 = vpack.c.b16 %v1426, %v1422
    %v1667 = vpack.c.b16 %v1427, %v1423
    %v1668 = vpack.c.b16 %v1428, %v1424
    %v1669 = vpack.c.b16 %v1429, %v1425
    %v1670 = vpack.c.b16 %v1434, %v1430
    %v1671 = vpack.c.b16 %v1435, %v1431
    %v1672 = vpack.c.b16 %v1436, %v1432
    %v1673 = vpack.c.b16 %v1437, %v1433
    %v1674 = vpack.c.b16 %v1442, %v1438
    %v1675 = vpack.c.b16 %v1443, %v1439
    %v1676 = vpack.c.b16 %v1444, %v1440
    %v1677 = vpack.c.b16 %v1445, %v1441
    %v1678 = vpack.c.b16 %v1450, %v1446
    %v1679 = vpack.c.b16 %v1451, %v1447
    %v1680 = vpack.c.b16 %v1452, %v1448
    %v1681 = vpack.c.b16 %v1453, %v1449
    %v1682 = vpack.c.b16 %v1458, %v1454
    %v1683 = vpack.c.b16 %v1459, %v1455
    %v1684 = vpack.c.b16 %v1460, %v1456
    %v1685 = vpack.c.b16 %v1461, %v1457
    %v1686 = vpack.c.b16 %v1466, %v1462
    %v1687 = vpack.c.b16 %v1467, %v1463
    %v1688 = vpack.c.b16 %v1468, %v1464
    %v1689 = vpack.c.b16 %v1469, %v1465
    %v1690 = vpack.c.b16 %v1474, %v1470
    %v1691 = vpack.c.b16 %v1475, %v1471
    %v1692 = vpack.c.b16 %v1476, %v1472
    %v1693 = vpack.c.b16 %v1477, %v1473
    %v1694 = vpack.c.b16 %v1482, %v1478
    %v1695 = vpack.c.b16 %v1483, %v1479
    %v1696 = vpack.c.b16 %v1484, %v1480
    %v1697 = vpack.c.b16 %v1485, %v1481
    %v1698 = vpack.c.b16 %v1490, %v1486
    %v1699 = vpack.c.b16 %v1491, %v1487
    %v1700 = vpack.c.b16 %v1492, %v1488
    %v1701 = vpack.c.b16 %v1493, %v1489
    %v1702 = vpack.c.b16 %v1498, %v1494
    %v1703 = vpack.c.b16 %v1499, %v1495
    %v1704 = vpack.c.b16 %v1500, %v1496
    %v1705 = vpack.c.b16 %v1501, %v1497
    %v1706 = vpack.c.b16 %v1506, %v1502
    %v1707 = vpack.c.b16 %v1507, %v1503
    %v1708 = vpack.c.b16 %v1508, %v1504
    %v1709 = vpack.c.b16 %v1509, %v1505
    %v1710 = vpack.c.b16 %v1514, %v1510
    %v1711 = vpack.c.b16 %v1515, %v1511
    %v1712 = vpack.c.b16 %v1516, %v1512
    %v1713 = vpack.c.b16 %v1517, %v1513
    %v1714 = vpack.c.b16 %v1522, %v1518
    %v1715 = vpack.c.b16 %v1523, %v1519
    %v1716 = vpack.c.b16 %v1524, %v1520
    %v1717 = vpack.c.b16 %v1525, %v1521
    %v1718 = vpack.c.b16 %v1530, %v1526
    %v1719 = vpack.c.b16 %v1531, %v1527
    %v1720 = vpack.c.b16 %v1532, %v1528
    %v1721 = vpack.c.b16 %v1533, %v1529
    %v1722 = vpack.c.b16 %v1538, %v1534
    %v1723 = vpack.c.b16 %v1539, %v1535
    %v1724 = vpack.c.b16 %v1540, %v1536
    %v1725 = vpack.c.b16 %v1541, %v1537
    %v1726 = vpack.c.b16 %v1546, %v1542
    %v1727 = vpack.c.b16 %v1547, %v1543
    %v1728 = vpack.c.b16 %v1548, %v1544
    %v1729 = vpack.c.b16 %v1549, %v1545
    %v1730 = vpack.c.b16 %v1554, %v1550
    %v1731 = vpack.c.b16 %v1555, %v1551
    %v1732 = vpack.c.b16 %v1556, %v1552
    %v1733 = vpack.c.b16 %v1557, %v1553
    %v1734 = vpack.c.b16 %v1562, %v1558
    %v1735 = vpack.c.b16 %v1563, %v1559
    %v1736 = vpack.c.b16 %v1564, %v1560
    %v1737 = vpack.c.b16 %v1565, %v1561
    %v1738 = vpack.c.b16 %v1570, %v1566
    %v1739 = vpack.c.b16 %v1571, %v1567
    %v1740 = vpack.c.b16 %v1572, %v1568
    %v1741 = vpack.c.b16 %v1573, %v1569
    %v1742 = vpack.c.b16 %v1578, %v1574
    %v1743 = vpack.c.b16 %v1579, %v1575
    %v1744 = vpack.c.b16 %v1580, %v1576
    %v1745 = vpack.c.b16 %v1581, %v1577
    %v1746 = vpack.c.b16 %v1586, %v1582
    %v1747 = vpack.c.b16 %v1587, %v1583
    %v1748 = vpack.c.b16 %v1588, %v1584
    %v1749 = vpack.c.b16 %v1589, %v1585
    %v1750 = vpack.c.b16 %v1594, %v1590
    %v1751 = vpack.c.b16 %v1595, %v1591
    %v1752 = vpack.c.b16 %v1596, %v1592
    %v1753 = vpack.c.b16 %v1597, %v1593
    %v1754 = vpack.c.b16 %v1602, %v1598
    %v1755 = vpack.c.b16 %v1603, %v1599
    %v1756 = vpack.c.b16 %v1604, %v1600
    %v1757 = vpack.c.b16 %v1605, %v1601
    %v1758 = vpack.c.b16 %v1610, %v1606
    %v1759 = vpack.c.b16 %v1611, %v1607
    %v1760 = vpack.c.b16 %v1612, %v1608
    %v1761 = vpack.c.b16 %v1613, %v1609
    %v1762 = vpack.c.b16 %v1618, %v1614
    %v1763 = vpack.c.b16 %v1619, %v1615
    %v1764 = vpack.c.b16 %v1620, %v1616
    %v1765 = vpack.c.b16 %v1621, %v1617
    %v1766 = vpack.c.b16 %v1626, %v1622
    %v1767 = vpack.c.b16 %v1627, %v1623
    %v1768 = vpack.c.b16 %v1628, %v1624
    %v1769 = vpack.c.b16 %v1629, %v1625
    %v1770 = vpack.c.b16 %v1634, %v1630
    %v1771 = vpack.c.b16 %v1635, %v1631
    %v1772 = vpack.c.b16 %v1636, %v1632
    %v1773 = vpack.c.b16 %v1637, %v1633
    %v1774 = vpack.c.b16 %v1642, %v1638
    %v1775 = vpack.c.b16 %v1643, %v1639
    %v1776 = vpack.c.b16 %v1644, %v1640
    %v1777 = vpack.c.b16 %v1645, %v1641
    %v1778 = vpack.c.b16 %v1650, %v1646
    %v1779 = vpack.c.b16 %v1651, %v1647
    %v1780 = vpack.c.b16 %v1652, %v1648
    %v1781 = vpack.c.b16 %v1653, %v1649
    %1910 = vmatprep.subr.bf16.mxu0 %v1683
    %1911 = vmatpush1.bf16.msra.mxu0 %v1682
    %1912 = vmatprep.subr.bf16.mxu0 %v1679
    %1913 = vmatpush1.bf16.msra.mxu0 %v1678
    %1914 = vmatprep.subr.bf16.mxu0 %v1675
    %1915 = vmatpush1.bf16.msra.mxu0 %v1674
    %1916 = vmatprep.subr.bf16.mxu0 %v1671
    %1917 = vmatpush1.bf16.msra.mxu0 %v1670
    %1918 = vmatprep.subr.bf16.mxu0 %v1667
    %1919 = vmatpush1.bf16.msra.mxu0 %v1666
    %1920 = vmatprep.subr.bf16.mxu0 %v1663
    %1921 = vmatpush1.bf16.msra.mxu0 %v1662
    %1922 = vmatprep.subr.bf16.mxu0 %v1659
    %1923 = vmatpush1.bf16.msra.mxu0 %v1658
    %1924 = vmatprep.subr.bf16.mxu0 %v1655
    %1925 = vmatpush1.bf16.msra.mxu0 %v1654
    %1926 = vmatprep.subr.bf16.mxu0 %v1715
    %1927 = vmatpush2.bf16.msra.mxu0 %v1714
    %1928 = vmatprep.subr.bf16.mxu0 %v1711
    %1929 = vmatpush2.bf16.msra.mxu0 %v1710
    %1930 = vmatprep.subr.bf16.mxu0 %v1707
    %1931 = vmatpush2.bf16.msra.mxu0 %v1706
    %1932 = vmatprep.subr.bf16.mxu0 %v1703
    %1933 = vmatpush2.bf16.msra.mxu0 %v1702
    %1934 = vmatprep.subr.bf16.mxu0 %v1699
    %1935 = vmatpush2.bf16.msra.mxu0 %v1698
    %1936 = vmatprep.subr.bf16.mxu0 %v1695
    %1937 = vmatpush2.bf16.msra.mxu0 %v1694
    %1938 = vmatprep.subr.bf16.mxu0 %v1691
    %1939 = vmatpush2.bf16.msra.mxu0 %v1690
    %1940 = vmatprep.subr.bf16.mxu0 %v1687
    %1941 = vmatpush2.bf16.msra.mxu0 %v1686
    %1942 = vmatprep.mubr.bf16.mxu0 %v1117
    %1943 = vmatmul.mubr.bf16.gmra.mxu0 %v1116
    %v1944 = vpop.f32.mrf.mxu0
    %v1945 = vadd.f32 %v1253, %v1944
    %v1946 = vpop.f32.mrf.mxu0
    %v1947 = vadd.f32 %v1257, %v1946
    %v1948 = vpop.f32.mrf.mxu0
    %v1949 = vpop.f32.mrf.mxu0
    %1950 = vdwg.mxu0
    %1951 = vmatprep.subr.bf16.mxu0 %v1747
    %1952 = vmatpush1.bf16.msra.mxu0 %v1746
    %1953 = vmatprep.subr.bf16.mxu0 %v1743
    %1954 = vmatpush1.bf16.msra.mxu0 %v1742
    %1955 = vmatprep.subr.bf16.mxu0 %v1739
    %1956 = vmatpush1.bf16.msra.mxu0 %v1738
    %1957 = vmatprep.subr.bf16.mxu0 %v1735
    %1958 = vmatpush1.bf16.msra.mxu0 %v1734
    %1959 = vmatprep.subr.bf16.mxu0 %v1731
    %1960 = vmatpush1.bf16.msra.mxu0 %v1730
    %1961 = vmatprep.subr.bf16.mxu0 %v1727
    %1962 = vmatpush1.bf16.msra.mxu0 %v1726
    %1963 = vmatprep.subr.bf16.mxu0 %v1723
    %1964 = vmatpush1.bf16.msra.mxu0 %v1722
    %1965 = vmatprep.subr.bf16.mxu0 %v1719
    %1966 = vmatpush1.bf16.msra.mxu0 %v1718
    %1967 = vmatprep.subr.bf16.mxu0 %v1779
    %1968 = vmatpush2.bf16.msra.mxu0 %v1778
    %1969 = vmatprep.subr.bf16.mxu0 %v1775
    %1970 = vmatpush2.bf16.msra.mxu0 %v1774
    %1971 = vmatprep.subr.bf16.mxu0 %v1771
    %1972 = vmatpush2.bf16.msra.mxu0 %v1770
    %1973 = vmatprep.subr.bf16.mxu0 %v1767
    %1974 = vmatpush2.bf16.msra.mxu0 %v1766
    %1975 = vmatprep.subr.bf16.mxu0 %v1763
    %1976 = vmatpush2.bf16.msra.mxu0 %v1762
    %1977 = vmatprep.subr.bf16.mxu0 %v1759
    %1978 = vmatpush2.bf16.msra.mxu0 %v1758
    %1979 = vmatprep.subr.bf16.mxu0 %v1755
    %1980 = vmatpush2.bf16.msra.mxu0 %v1754
    %1981 = vmatprep.subr.bf16.mxu0 %v1751
    %1982 = vmatpush2.bf16.msra.mxu0 %v1750
    %1983 = vmatprep.mubr.bf16.mxu0 %v1119
    %1984 = vmatmul.mubr.bf16.gmra.mxu0 %v1118
    %v1985 = vpop.f32.mrf.mxu0
    %v1986 = vadd.f32 %v1945, %v1985
    %v1987 = vpop.f32.mrf.mxu0
    %v1988 = vadd.f32 %v1947, %v1987
    %v1989 = vpop.f32.mrf.mxu0
    %v1990 = vpop.f32.mrf.mxu0
    %1991 = vdwg.mxu0
    %1992 = vmatprep.subr.bf16.mxu0 %v1685
    %1993 = vmatpush1.bf16.msra.mxu0 %v1684
    %1994 = vmatprep.subr.bf16.mxu0 %v1681
    %1995 = vmatpush1.bf16.msra.mxu0 %v1680
    %1996 = vmatprep.subr.bf16.mxu0 %v1677
    %1997 = vmatpush1.bf16.msra.mxu0 %v1676
    %1998 = vmatprep.subr.bf16.mxu0 %v1673
    %1999 = vmatpush1.bf16.msra.mxu0 %v1672
    %2000 = vmatprep.subr.bf16.mxu0 %v1669
    %2001 = vmatpush1.bf16.msra.mxu0 %v1668
    %2002 = vmatprep.subr.bf16.mxu0 %v1665
    %2003 = vmatpush1.bf16.msra.mxu0 %v1664
    %2004 = vmatprep.subr.bf16.mxu0 %v1661
    %2005 = vmatpush1.bf16.msra.mxu0 %v1660
    %2006 = vmatprep.subr.bf16.mxu0 %v1657
    %2007 = vmatpush1.bf16.msra.mxu0 %v1656
    %2008 = vmatprep.subr.bf16.mxu0 %v1717
    %2009 = vmatpush2.bf16.msra.mxu0 %v1716
    %2010 = vmatprep.subr.bf16.mxu0 %v1713
    %2011 = vmatpush2.bf16.msra.mxu0 %v1712
    %2012 = vmatprep.subr.bf16.mxu0 %v1709
    %2013 = vmatpush2.bf16.msra.mxu0 %v1708
    %2014 = vmatprep.subr.bf16.mxu0 %v1705
    %2015 = vmatpush2.bf16.msra.mxu0 %v1704
    %2016 = vmatprep.subr.bf16.mxu0 %v1701
    %2017 = vmatpush2.bf16.msra.mxu0 %v1700
    %2018 = vmatprep.subr.bf16.mxu0 %v1697
    %2019 = vmatpush2.bf16.msra.mxu0 %v1696
    %2020 = vmatprep.subr.bf16.mxu0 %v1693
    %2021 = vmatpush2.bf16.msra.mxu0 %v1692
    %2022 = vmatprep.subr.bf16.mxu0 %v1689
    %2023 = vmatpush2.bf16.msra.mxu0 %v1688
    %2024 = vmatprep.mubr.bf16.mxu0 %v1117
    %2025 = vmatmul.mubr.bf16.gmra.mxu0 %v1116
    %v2026 = vpop.f32.mrf.mxu0
    %v2027 = vadd.f32 %v1261, %v2026
    %v2028 = vpop.f32.mrf.mxu0
    %v2029 = vadd.f32 %v1265, %v2028
    %v2030 = vpop.f32.mrf.mxu0
    %v2031 = vpop.f32.mrf.mxu0
    %2032 = vdwg.mxu0
    %2033 = vmatprep.subr.bf16.mxu0 %v1749
    %2034 = vmatpush1.bf16.msra.mxu0 %v1748
    %2035 = vmatprep.subr.bf16.mxu0 %v1745
    %2036 = vmatpush1.bf16.msra.mxu0 %v1744
    %2037 = vmatprep.subr.bf16.mxu0 %v1741
    %2038 = vmatpush1.bf16.msra.mxu0 %v1740
    %2039 = vmatprep.subr.bf16.mxu0 %v1737
    %2040 = vmatpush1.bf16.msra.mxu0 %v1736
    %2041 = vmatprep.subr.bf16.mxu0 %v1733
    %2042 = vmatpush1.bf16.msra.mxu0 %v1732
    %2043 = vmatprep.subr.bf16.mxu0 %v1729
    %2044 = vmatpush1.bf16.msra.mxu0 %v1728
    %2045 = vmatprep.subr.bf16.mxu0 %v1725
    %2046 = vmatpush1.bf16.msra.mxu0 %v1724
    %2047 = vmatprep.subr.bf16.mxu0 %v1721
    %2048 = vmatpush1.bf16.msra.mxu0 %v1720
    %2049 = vmatprep.subr.bf16.mxu0 %v1781
    %2050 = vmatpush2.bf16.msra.mxu0 %v1780
    %2051 = vmatprep.subr.bf16.mxu0 %v1777
    %2052 = vmatpush2.bf16.msra.mxu0 %v1776
    %2053 = vmatprep.subr.bf16.mxu0 %v1773
    %2054 = vmatpush2.bf16.msra.mxu0 %v1772
    %2055 = vmatprep.subr.bf16.mxu0 %v1769
    %2056 = vmatpush2.bf16.msra.mxu0 %v1768
    %2057 = vmatprep.subr.bf16.mxu0 %v1765
    %2058 = vmatpush2.bf16.msra.mxu0 %v1764
    %2059 = vmatprep.subr.bf16.mxu0 %v1761
    %2060 = vmatpush2.bf16.msra.mxu0 %v1760
    %2061 = vmatprep.subr.bf16.mxu0 %v1757
    %2062 = vmatpush2.bf16.msra.mxu0 %v1756
    %2063 = vmatprep.subr.bf16.mxu0 %v1753
    %2064 = vmatpush2.bf16.msra.mxu0 %v1752
    %2065 = vmatprep.mubr.bf16.mxu0 %v1119
    %2066 = vmatmul.mubr.bf16.gmra.mxu0 %v1118
    %v2067 = vpop.f32.mrf.mxu0
    %v2068 = vadd.f32 %v2027, %v2067
    %v2069 = vpop.f32.mrf.mxu0
    %v2070 = vadd.f32 %v2029, %v2069
    %v2071 = vpop.f32.mrf.mxu0
    %v2072 = vpop.f32.mrf.mxu0
    %2073 = vdwg.mxu0
    %v2074 = vmax.f32 %v1986, 0.0
    %v2075 = vmax.f32 %v1988, 0.0
    %v2076 = vmax.f32 %v2068, 0.0
    %v2077 = vmax.f32 %v2070, 0.0
    %v2078 = vpack.c.bf16 %v2074, %v2074
    %v2079 = vpack.c.bf16 %v2075, %v2075
    %v2080 = vpack.c.bf16 %v2076, %v2076
    %v2081 = vpack.c.bf16 %v2077, %v2077
    %v2082 = vld [vmem:[#allocation11] sm:$0xf]
    %v2083 = vld [vmem:[#allocation11 + $0x4] sm:$0xf]
    %v2084 = vld [vmem:[#allocation11 + $0x8] sm:$0xf]
    %v2085 = vld [vmem:[#allocation11 + $0xc] sm:$0xf]
    %v2086 = vld [vmem:[#allocation11 + $0x10] sm:$0xf]
    %v2087 = vld [vmem:[#allocation11 + $0x14] sm:$0xf]
    %v2088 = vld [vmem:[#allocation11 + $0x18] sm:$0xf]
    %v2089 = vld [vmem:[#allocation11 + $0x1c] sm:$0xf]
    %v2090 = vld [vmem:[#allocation11 + $0x20] sm:$0xf]
    %v2091 = vld [vmem:[#allocation11 + $0x24] sm:$0xf]
    %v2092 = vld [vmem:[#allocation11 + $0x28] sm:$0xf]
    %v2093 = vld [vmem:[#allocation11 + $0x2c] sm:$0xf]
    %v2094 = vld [vmem:[#allocation11 + $0x30] sm:$0xf]
    %v2095 = vld [vmem:[#allocation11 + $0x34] sm:$0xf]
    %v2096 = vld [vmem:[#allocation11 + $0x38] sm:$0xf]
    %v2097 = vld [vmem:[#allocation11 + $0x3c] sm:$0xf]
    %v2098 = vld [vmem:[#allocation11 + $0x40] sm:$0xf]
    %v2099 = vld [vmem:[#allocation11 + $0x44] sm:$0xf]
    %v2100 = vld [vmem:[#allocation11 + $0x48] sm:$0xf]
    %v2101 = vld [vmem:[#allocation11 + $0x4c] sm:$0xf]
    %v2102 = vld [vmem:[#allocation11 + $0x50] sm:$0xf]
    %v2103 = vld [vmem:[#allocation11 + $0x54] sm:$0xf]
    %v2104 = vld [vmem:[#allocation11 + $0x58] sm:$0xf]
    %v2105 = vld [vmem:[#allocation11 + $0x5c] sm:$0xf]
    %v2106 = vld [vmem:[#allocation11 + $0x60] sm:$0xf]
    %v2107 = vld [vmem:[#allocation11 + $0x64] sm:$0xf]
    %v2108 = vld [vmem:[#allocation11 + $0x68] sm:$0xf]
    %v2109 = vld [vmem:[#allocation11 + $0x6c] sm:$0xf]
    %v2110 = vld [vmem:[#allocation11 + $0x70] sm:$0xf]
    %v2111 = vld [vmem:[#allocation11 + $0x74] sm:$0xf]
    %v2112 = vld [vmem:[#allocation11 + $0x78] sm:$0xf]
    %v2113 = vld [vmem:[#allocation11 + $0x7c] sm:$0xf]
    %v2114 = vld [vmem:[#allocation11 + $0x80] sm:$0xf]
    %v2115 = vld [vmem:[#allocation11 + $0x84] sm:$0xf]
    %v2116 = vld [vmem:[#allocation11 + $0x88] sm:$0xf]
    %v2117 = vld [vmem:[#allocation11 + $0x8c] sm:$0xf]
    %v2118 = vld [vmem:[#allocation11 + $0x90] sm:$0xf]
    %v2119 = vld [vmem:[#allocation11 + $0x94] sm:$0xf]
    %v2120 = vld [vmem:[#allocation11 + $0x98] sm:$0xf]
    %v2121 = vld [vmem:[#allocation11 + $0x9c] sm:$0xf]
    %v2122 = vld [vmem:[#allocation11 + $0xa0] sm:$0xf]
    %v2123 = vld [vmem:[#allocation11 + $0xa4] sm:$0xf]
    %v2124 = vld [vmem:[#allocation11 + $0xa8] sm:$0xf]
    %v2125 = vld [vmem:[#allocation11 + $0xac] sm:$0xf]
    %v2126 = vld [vmem:[#allocation11 + $0xb0] sm:$0xf]
    %v2127 = vld [vmem:[#allocation11 + $0xb4] sm:$0xf]
    %v2128 = vld [vmem:[#allocation11 + $0xb8] sm:$0xf]
    %v2129 = vld [vmem:[#allocation11 + $0xbc] sm:$0xf]
    %v2130 = vld [vmem:[#allocation11 + $0xc0] sm:$0xf]
    %v2131 = vld [vmem:[#allocation11 + $0xc4] sm:$0xf]
    %v2132 = vld [vmem:[#allocation11 + $0xc8] sm:$0xf]
    %v2133 = vld [vmem:[#allocation11 + $0xcc] sm:$0xf]
    %v2134 = vld [vmem:[#allocation11 + $0xd0] sm:$0xf]
    %v2135 = vld [vmem:[#allocation11 + $0xd4] sm:$0xf]
    %v2136 = vld [vmem:[#allocation11 + $0xd8] sm:$0xf]
    %v2137 = vld [vmem:[#allocation11 + $0xdc] sm:$0xf]
    %v2138 = vld [vmem:[#allocation11 + $0xe0] sm:$0xf]
    %v2139 = vld [vmem:[#allocation11 + $0xe4] sm:$0xf]
    %v2140 = vld [vmem:[#allocation11 + $0xe8] sm:$0xf]
    %v2141 = vld [vmem:[#allocation11 + $0xec] sm:$0xf]
    %v2142 = vld [vmem:[#allocation11 + $0xf0] sm:$0xf]
    %v2143 = vld [vmem:[#allocation11 + $0xf4] sm:$0xf]
    %v2144 = vld [vmem:[#allocation11 + $0xf8] sm:$0xf]
    %v2145 = vld [vmem:[#allocation11 + $0xfc] sm:$0xf]
    %v2146 = vld [vmem:[%s6] sm:$0x1]
    %v2148 = vlaneseq
    %v2149 = vshrl.u32 %v2148, 7
    %v2150 = vsub.s32 0, %v2149
    %v2151 = vrot.slane %v2146, %v2150
    %v2217 = vunpack.c.l.b16 %v2082
    %v2218 = vunpack.c.l.b16 %v2083
    %v2219 = vunpack.c.l.b16 %v2084
    %v2220 = vunpack.c.l.b16 %v2085
    %v2221 = vunpack.c.l.b16 %v2086
    %v2222 = vunpack.c.l.b16 %v2087
    %v2223 = vunpack.c.l.b16 %v2088
    %v2224 = vunpack.c.l.b16 %v2089
    %v2225 = vunpack.c.l.b16 %v2090
    %v2226 = vunpack.c.l.b16 %v2091
    %v2227 = vunpack.c.l.b16 %v2092
    %v2228 = vunpack.c.l.b16 %v2093
    %v2229 = vunpack.c.l.b16 %v2094
    %v2230 = vunpack.c.l.b16 %v2095
    %v2231 = vunpack.c.l.b16 %v2096
    %v2232 = vunpack.c.l.b16 %v2097
    %v2233 = vunpack.c.l.b16 %v2098
    %v2234 = vunpack.c.l.b16 %v2099
    %v2235 = vunpack.c.l.b16 %v2100
    %v2236 = vunpack.c.l.b16 %v2101
    %v2237 = vunpack.c.l.b16 %v2102
    %v2238 = vunpack.c.l.b16 %v2103
    %v2239 = vunpack.c.l.b16 %v2104
    %v2240 = vunpack.c.l.b16 %v2105
    %v2241 = vunpack.c.l.b16 %v2106
    %v2242 = vunpack.c.l.b16 %v2107
    %v2243 = vunpack.c.l.b16 %v2108
    %v2244 = vunpack.c.l.b16 %v2109
    %v2245 = vunpack.c.l.b16 %v2110
    %v2246 = vunpack.c.l.b16 %v2111
    %v2247 = vunpack.c.l.b16 %v2112
    %v2248 = vunpack.c.l.b16 %v2113
    %v2249 = vunpack.c.l.b16 %v2114
    %v2250 = vunpack.c.l.b16 %v2115
    %v2251 = vunpack.c.l.b16 %v2116
    %v2252 = vunpack.c.l.b16 %v2117
    %v2253 = vunpack.c.l.b16 %v2118
    %v2254 = vunpack.c.l.b16 %v2119
    %v2255 = vunpack.c.l.b16 %v2120
    %v2256 = vunpack.c.l.b16 %v2121
    %v2257 = vunpack.c.l.b16 %v2122
    %v2258 = vunpack.c.l.b16 %v2123
    %v2259 = vunpack.c.l.b16 %v2124
    %v2260 = vunpack.c.l.b16 %v2125
    %v2261 = vunpack.c.l.b16 %v2126
    %v2262 = vunpack.c.l.b16 %v2127
    %v2263 = vunpack.c.l.b16 %v2128
    %v2264 = vunpack.c.l.b16 %v2129
    %v2265 = vunpack.c.l.b16 %v2130
    %v2266 = vunpack.c.l.b16 %v2131
    %v2267 = vunpack.c.l.b16 %v2132
    %v2268 = vunpack.c.l.b16 %v2133
    %v2269 = vunpack.c.l.b16 %v2134
    %v2270 = vunpack.c.l.b16 %v2135
    %v2271 = vunpack.c.l.b16 %v2136
    %v2272 = vunpack.c.l.b16 %v2137
    %v2273 = vunpack.c.l.b16 %v2138
    %v2274 = vunpack.c.l.b16 %v2139
    %v2275 = vunpack.c.l.b16 %v2140
    %v2276 = vunpack.c.l.b16 %v2141
    %v2277 = vunpack.c.l.b16 %v2142
    %v2278 = vunpack.c.l.b16 %v2143
    %v2279 = vunpack.c.l.b16 %v2144
    %v2280 = vunpack.c.l.b16 %v2145
    %v2281 = vpack.c.b16 %v2218, %v2217
    %v2282 = vpack.c.b16 %v2220, %v2219
    %v2283 = vpack.c.b16 %v2222, %v2221
    %v2284 = vpack.c.b16 %v2224, %v2223
    %v2285 = vpack.c.b16 %v2226, %v2225
    %v2286 = vpack.c.b16 %v2228, %v2227
    %v2287 = vpack.c.b16 %v2230, %v2229
    %v2288 = vpack.c.b16 %v2232, %v2231
    %v2289 = vpack.c.b16 %v2234, %v2233
    %v2290 = vpack.c.b16 %v2236, %v2235
    %v2291 = vpack.c.b16 %v2238, %v2237
    %v2292 = vpack.c.b16 %v2240, %v2239
    %v2293 = vpack.c.b16 %v2242, %v2241
    %v2294 = vpack.c.b16 %v2244, %v2243
    %v2295 = vpack.c.b16 %v2246, %v2245
    %v2296 = vpack.c.b16 %v2248, %v2247
    %v2297 = vpack.c.b16 %v2250, %v2249
    %v2298 = vpack.c.b16 %v2252, %v2251
    %v2299 = vpack.c.b16 %v2254, %v2253
    %v2300 = vpack.c.b16 %v2256, %v2255
    %v2301 = vpack.c.b16 %v2258, %v2257
    %v2302 = vpack.c.b16 %v2260, %v2259
    %v2303 = vpack.c.b16 %v2262, %v2261
    %v2304 = vpack.c.b16 %v2264, %v2263
    %v2305 = vpack.c.b16 %v2266, %v2265
    %v2306 = vpack.c.b16 %v2268, %v2267
    %v2307 = vpack.c.b16 %v2270, %v2269
    %v2308 = vpack.c.b16 %v2272, %v2271
    %v2309 = vpack.c.b16 %v2274, %v2273
    %v2310 = vpack.c.b16 %v2276, %v2275
    %v2311 = vpack.c.b16 %v2278, %v2277
    %v2312 = vpack.c.b16 %v2280, %v2279
    %2345 = vmatprep.subr.bf16.mxu0 0
    %2346 = vmatpush1.bf16.msra.mxu0 %v2288
    %2347 = vmatprep.subr.bf16.mxu0 0
    %2348 = vmatpush1.bf16.msra.mxu0 %v2287
    %2349 = vmatprep.subr.bf16.mxu0 0
    %2350 = vmatpush1.bf16.msra.mxu0 %v2286
    %2351 = vmatprep.subr.bf16.mxu0 0
    %2352 = vmatpush1.bf16.msra.mxu0 %v2285
    %2353 = vmatprep.subr.bf16.mxu0 0
    %2354 = vmatpush1.bf16.msra.mxu0 %v2284
    %2355 = vmatprep.subr.bf16.mxu0 0
    %2356 = vmatpush1.bf16.msra.mxu0 %v2283
    %2357 = vmatprep.subr.bf16.mxu0 0
    %2358 = vmatpush1.bf16.msra.mxu0 %v2282
    %2359 = vmatprep.subr.bf16.mxu0 0
    %2360 = vmatpush1.bf16.msra.mxu0 %v2281
    %2361 = vmatprep.subr.bf16.mxu0 0
    %2362 = vmatpush2.bf16.msra.mxu0 %v2296
    %2363 = vmatprep.subr.bf16.mxu0 0
    %2364 = vmatpush2.bf16.msra.mxu0 %v2295
    %2365 = vmatprep.subr.bf16.mxu0 0
    %2366 = vmatpush2.bf16.msra.mxu0 %v2294
    %2367 = vmatprep.subr.bf16.mxu0 0
    %2368 = vmatpush2.bf16.msra.mxu0 %v2293
    %2369 = vmatprep.subr.bf16.mxu0 0
    %2370 = vmatpush2.bf16.msra.mxu0 %v2292
    %2371 = vmatprep.subr.bf16.mxu0 0
    %2372 = vmatpush2.bf16.msra.mxu0 %v2291
    %2373 = vmatprep.subr.bf16.mxu0 0
    %2374 = vmatpush2.bf16.msra.mxu0 %v2290
    %2375 = vmatprep.subr.bf16.mxu0 0
    %2376 = vmatpush2.bf16.msra.mxu0 %v2289
    %2377 = vmatprep.mubr.bf16.mxu0 %v2079
    %2378 = vmatmul.mubr.bf16.gmra.mxu0 %v2078
    %v2379 = vpop.f32.mrf.mxu0
    %v2380 = vadd.f32 %v2151, %v2379
    %v2381 = vpop.f32.mrf.mxu0
    %v2382 = vpop.f32.mrf.mxu0
    %v2383 = vpop.f32.mrf.mxu0
    %2384 = vdwg.mxu0
    %2385 = vmatprep.subr.bf16.mxu0 0
    %2386 = vmatpush1.bf16.msra.mxu0 %v2304
    %2387 = vmatprep.subr.bf16.mxu0 0
    %2388 = vmatpush1.bf16.msra.mxu0 %v2303
    %2389 = vmatprep.subr.bf16.mxu0 0
    %2390 = vmatpush1.bf16.msra.mxu0 %v2302
    %2391 = vmatprep.subr.bf16.mxu0 0
    %2392 = vmatpush1.bf16.msra.mxu0 %v2301
    %2393 = vmatprep.subr.bf16.mxu0 0
    %2394 = vmatpush1.bf16.msra.mxu0 %v2300
    %2395 = vmatprep.subr.bf16.mxu0 0
    %2396 = vmatpush1.bf16.msra.mxu0 %v2299
    %2397 = vmatprep.subr.bf16.mxu0 0
    %2398 = vmatpush1.bf16.msra.mxu0 %v2298
    %2399 = vmatprep.subr.bf16.mxu0 0
    %2400 = vmatpush1.bf16.msra.mxu0 %v2297
    %2401 = vmatprep.subr.bf16.mxu0 0
    %2402 = vmatpush2.bf16.msra.mxu0 %v2312
    %2403 = vmatprep.subr.bf16.mxu0 0
    %2404 = vmatpush2.bf16.msra.mxu0 %v2311
    %2405 = vmatprep.subr.bf16.mxu0 0
    %2406 = vmatpush2.bf16.msra.mxu0 %v2310
    %2407 = vmatprep.subr.bf16.mxu0 0
    %2408 = vmatpush2.bf16.msra.mxu0 %v2309
    %2409 = vmatprep.subr.bf16.mxu0 0
    %2410 = vmatpush2.bf16.msra.mxu0 %v2308
    %2411 = vmatprep.subr.bf16.mxu0 0
    %2412 = vmatpush2.bf16.msra.mxu0 %v2307
    %2413 = vmatprep.subr.bf16.mxu0 0
    %2414 = vmatpush2.bf16.msra.mxu0 %v2306
    %2415 = vmatprep.subr.bf16.mxu0 0
    %2416 = vmatpush2.bf16.msra.mxu0 %v2305
    %2417 = vmatprep.mubr.bf16.mxu0 %v2081
    %2418 = vmatmul.mubr.bf16.gmra.mxu0 %v2080
    %v2419 = vpop.f32.mrf.mxu0
    %v2420 = vadd.f32 %v2380, %v2419
    %v2421 = vpop.f32.mrf.mxu0
    %v2422 = vpop.f32.mrf.mxu0
    %v2423 = vpop.f32.mrf.mxu0
    %2424 = vdwg.mxu0
    %2425 = vst [vmem:[#allocation13] sm:$0xff] %v2420
    // Predicated region
    $region54: #{label_predictor_forward.1} parent=1 // pred_check
      _
    $region55: #{label_predictor_forward.1} parent=1 // pred_check_branch
      %2427 = sbr.rel (0) target = $region57
    $region56: #{label_predictor_forward.1} parent=1 // pred_region
      %s2429 = ssub.s32 128, 32
      %2430 = vsyncadd [#allocation4], %s2429
      %s2431 = sshll.u32 [#allocation13], 4
      %s2432 = int_to_ptr.vmem [resolvable:$true] %s2431
      %2437 = dma.vmem_to_hbm [thread:$0]  %s2432, 32, %s7, [#allocation4], 32, 32, 2
    $region57: #{label_predictor_forward.1} parent=1 // pred_fallthru
      _
    // Predicated region
    $region58: #{label_predictor_forward.1} parent=1 // pred_check
      _
    $region59: #{label_predictor_forward.1} parent=1 // pred_check_branch
      %2439 = sbr.rel (0) target = $region61
    $region60: #{label_predictor_forward.1} parent=1 // pred_region
      %2440 = dma.done [#allocation4], 128
    $region61: #{label_predictor_forward.1} parent=1 // pred_fallthru
      _
    %2441 = vsyncpa [#allocation3], 1
    %2442 = vsyncpa [#allocation6], 1
    %2443 = vsyncpa [#allocation9], 1
    %2444 = vsyncpa [#allocation12], 1
    %2445 = vsyncpa [#allocation4], 1

</llo_original>
